<compile_context>
chip_gen: v6e
topology: v6e:2x2x1
jax: 0.10.0
libtpu: 0.0.40
codegen_flags: <defaults>
</compile_context>

<pallas_src>
import functools

import jax
import jax.numpy as jnp
from jax.experimental import pallas as pl
from jax.experimental.pallas import tpu as pltpu

DIM1 = 14 * 14          # 196 oscillators in stage 1
DIM2 = 14 * 14 + 10     # 206 oscillators in stage 2 (last 10 = readout)
NPAD = 256              # lane-aligned padded oscillator count (2 x 128)
HALF = NPAD // 2        # only the upper half of lanes is written back
NT = 5
T_END = 0.5
DT = T_END / NT         # 0.1
J_NOISE = 0.2
ETA = 0.1               # η


def C2Q(C):
    """Symmetrize and replace the diagonal with minus the column sums (torch C2Q)."""
    Q = (C + C.T) * 0.5
    col_sum = -jnp.sum(Q, axis=0)          # includes the (old) diagonal, like torch
    idx = jnp.arange(Q.shape[0])
    return Q.at[idx, idx].set(col_sum)


# ---------------------------------------------------------------------------
# One-time parameter preparation (hoisted out of the per-call hot path)
# ---------------------------------------------------------------------------
# Change of variables (exact up to f32 reassociation):
#   u = (1+eta)*q,  v = dt*(1+eta)*p
#   u_{t+1} = u_t + v_t
#   v_{t+1} = v_t + e'' + sin(u_t) @ M''
# with  M'' = dt^2*(1+eta)*(M - I)   and   e'' = dt^2*(1+eta)*e.
# This removes all per-step dt / (1+eta) VPU multiplies; the final readout is
# divided by (1+eta) in the wrapper (folded into output_fac).
_SCALE = DT * DT * (1.0 + ETA)


def _pad_fold_matrix(M, n):
    """Zero-pad (n,n)->(NPAD,NPAD), fold -I, pre-scale, cast to bf16 for the MXU.

    Padded lanes stay exactly zero: sin(0)=0 and the padded columns are zero
    (the -I on the padded diagonal only ever multiplies sin(u_pad)=0).
    """
    Mp = jnp.zeros((NPAD, NPAD), jnp.float32).at[:n, :n].set(M.astype(jnp.float32))
    Mp = (Mp - jnp.eye(NPAD, dtype=jnp.float32)) * jnp.float32(_SCALE)
    return Mp.astype(jnp.bfloat16)          # bf16 MXU operand, f32 accumulation


def _pad_bias(e, n):
    b = jnp.zeros((1, NPAD), jnp.float32).at[0, :n].set(e.astype(jnp.float32))
    return b * jnp.float32(_SCALE)


def prepare_net(params):
    """Padded, -I-folded, dt^2*(1+eta)-scaled, bf16-cast coupling matrices."""
    M1 = C2Q(params["fc1_w"]) + params["q_noise_small"]     # (196, 196)
    M2 = C2Q(params["fc2_w"]) + params["q_noise_large"]     # (206, 206)
    return {
        "m1": _pad_fold_matrix(M1, DIM1),
        "e1": _pad_bias(params["fc1_b"], DIM1),
        "m2": _pad_fold_matrix(M2, DIM2),
        "e2": _pad_bias(params["fc2_b"], DIM2),
        # output_fac / (1+eta): undoes the u = (1+eta)*q change of variables.
        "output_scale": jnp.asarray(params["output_fac"], jnp.float32)
                        / jnp.float32(1.0 + ETA),
    }


# ---------------------------------------------------------------------------
# Fused Pallas kernel: stage-1 ODE (196 osc) + stage-2 ODE (206 osc) in VMEM.
# Explicit Euler, Nt steps per stage, momentum re-zeroed between stages.
# ---------------------------------------------------------------------------
def _net_kernel(u_ref, m1_ref, e1_ref, m2_ref, e2_ref, out_ref, *, nt):
    u = u_ref[...]                              # (TILE_B, NPAD) f32, u = (1+eta)*q
    v0 = jnp.zeros_like(u)

    def euler_stage(u, m_bf16, e_row):
        def step(_, carry):
            uc, vc = carry
            sq = jnp.sin(uc)                    # f32 sin; bf16 only for the MXU feed
            u_new = uc + vc
            v_new = vc + e_row + jnp.dot(       # (1,N)+(T,N) implicit broadcast
                sq.astype(jnp.bfloat16), m_bf16,
                preferred_element_type=jnp.float32)
            return (u_new, v_new)
        u, _ = jax.lax.fori_loop(0, nt, step, (u, v0), unroll=True)
        return u

    # Stage 1: 196 real oscillators; lanes >= 196 stay exactly zero.
    u = euler_stage(u, m1_ref[...], e1_ref[...])
    # Stage 2: momentum re-zeroed; readout lanes 196:206 start at zero (already
    # true) and now couple through M2.
    u = euler_stage(u, m2_ref[...], e2_ref[...])

    # Only the upper lane half (contains lanes 128:256, incl. readout 196:206)
    # is written back: halves HBM writeback, still an exact 128-lane store.
    out_ref[...] = u[:, HALF:]


def _run_fused(u0, m1, e1, m2, e2, *, tile_b, nt=NT):
    b_pad, n = u0.shape
    grid = (b_pad // tile_b,)
    kernel = functools.partial(_net_kernel, nt=nt)
    return pl.pallas_call(
        kernel,
        out_shape=jax.ShapeDtypeStruct((b_pad, HALF), jnp.float32),
        grid_spec=pltpu.PrefetchScalarGridSpec(
            num_scalar_prefetch=0,
            grid=grid,
            in_specs=[
                pl.BlockSpec((tile_b, n), lambda b: (b, 0)),   # u0 batch tile
                pl.BlockSpec((n, n), lambda b: (0, 0)),        # M1'' bf16 (VMEM-resident)
                pl.BlockSpec((1, n), lambda b: (0, 0)),        # e1''
                pl.BlockSpec((n, n), lambda b: (0, 0)),        # M2'' bf16 (VMEM-resident)
                pl.BlockSpec((1, n), lambda b: (0, 0)),        # e2''
            ],
            out_specs=pl.BlockSpec((tile_b, HALF), lambda b: (b, 0)),
        ),
        compiler_params=pltpu.CompilerParams(
            # Batch tiles are independent -> shard across TCs on v7x megacore.
            dimension_semantics=("parallel",),
        ),
    )(u0, m1, e1, m2, e2)


def _pick_tile_b(B):
    """Batch tile: big tiles amortize grid overhead and feed the 256-wide MXU
    (v6e/v7x), but keep >=2 balanced tiles so the "parallel" axis actually
    shards across both v7x TensorCores (no-op on single-TC v5e/v6e)."""
    if B <= 8:
        return 8
    half = (((B + 1) // 2) + 7) // 8 * 8       # ceil(B/2), sublane-aligned
    return max(8, min(512, half))


# ---------------------------------------------------------------------------
# Net.forward
# ---------------------------------------------------------------------------
def net_forward(prepared, x):
    xf = x.reshape(-1, DIM1).astype(jnp.float32)            # x.view(-1, 14*14)
    B = xf.shape[0]

    tile_b = _pick_tile_b(B)
    b_pad = ((B + tile_b - 1) // tile_b) * tile_b

    # Pad batch + oscillator lanes to (b_pad, 256); padded lanes/rows are inert.
    # u = (1+eta)*q is the carried variable (dt/eta folded into the parameters).
    u0 = jnp.zeros((b_pad, NPAD), jnp.float32).at[:B, :DIM1].set(
        jnp.float32(1.0 + ETA) * xf)

    u3_half = _run_fused(u0, prepared["m1"], prepared["e1"],
                         prepared["m2"], prepared["e2"], tile_b=tile_b)

    # readout oscillators = lanes 196:206 of the padded layout -> cols 68:78
    # of the stored upper half; output_scale already contains the /(1+eta).
    return prepared["output_scale"] * u3_half[:B, DIM1 - HALF:DIM2 - HALF]


# ---------------------------------------------------------------------------
# Deterministic parameter construction (synthetic, no checkpoint)
# ---------------------------------------------------------------------------
def init_params(key):
    k1, k2, k3, k4, k5, k6 = jax.random.split(key, 6)
    b1 = 1.0 / jnp.sqrt(jnp.float32(DIM1))
    b2 = 1.0 / jnp.sqrt(jnp.float32(DIM2))
    return {
        "fc1_w": jax.random.uniform(k1, (DIM1, DIM1), jnp.float32, -b1, b1),
        "fc1_b": jax.random.uniform(k2, (DIM1,), jnp.float32, -b1, b1),
        "fc2_w": jax.random.uniform(k3, (DIM2, DIM2), jnp.float32, -b2, b2),
        "fc2_b": jax.random.uniform(k4, (DIM2,), jnp.float32, -b2, b2),
        "output_fac": jnp.float32(1.0),
        # Fixed experimental-noise matrices (Q_noise_small / Q_noise_large).
        "q_noise_small": C2Q(J_NOISE * jax.random.normal(k5, (DIM1, DIM1),
                                                         jnp.float32)),
        "q_noise_large": C2Q(J_NOISE * jax.random.normal(k6, (DIM2, DIM2),
                                                         jnp.float32)),
    }


# ---------------------------------------------------------------------------
# Pure-JAX reference (unpadded, f32, original torch op ordering) for validation.
# ---------------------------------------------------------------------------
def _ode_exp_map_ref(q, p, M, e, *, nt=NT, dt=DT, eta=ETA):
    e = e.reshape(1, -1)
    for _ in range(nt):
        sq = jnp.sin((1.0 + eta) * q)
        dq = p
        dp = -sq + e + sq @ M
        q, p = q + dt * dq, p + dt * dp
    return q, p


def net_forward_ref(params, x):
    xf = x.reshape(-1, DIM1).astype(jnp.float32)
    B = xf.shape[0]
    M1 = C2Q(params["fc1_w"]) + params["q_noise_small"]
    q1, _ = _ode_exp_map_ref(xf, jnp.zeros_like(xf), M1, params["fc1_b"])
    q2 = jnp.concatenate([q1, jnp.zeros((B, 10), jnp.float32)], axis=1)
    M2 = C2Q(params["fc2_w"]) + params["q_noise_large"]
    q3, _ = _ode_exp_map_ref(q2, jnp.zeros_like(q2), M2, params["fc2_b"])
    return params["output_fac"] * q3[:, -10:]


if __name__ == "__main__":
    key = jax.random.PRNGKey(0)
    pkey, xkey = jax.random.split(key)
    params = init_params(pkey)
    prepared = prepare_net(params)          # one-time (inference-static) prep

    # small deterministic example input: batch=2, NCHW (2, 1, 14, 14)
    x = jax.random.normal(xkey, (2, 1, 14, 14), jnp.float32)

    fwd = jax.jit(net_forward)
    out = jax.block_until_ready(fwd(prepared, x))

    ref = net_forward_ref(params, x)
    assert out.shape == (2, 10), out.shape
    # Tolerance slightly above 1e-3: the coupling matrices / sin(q) feed the
    # MXU in bf16 (f32 accumulation, f32 state) and dt/(1+eta) are folded into
    # the parameters, which reassociates rounding vs. the f32 reference.
    assert jnp.allclose(out, ref, rtol=5e-3, atol=5e-3), (
        "Pallas kernel output mismatch vs. pure-JAX reference: "
        f"max abs err {jnp.max(jnp.abs(out - ref))}")

    print("KERNEL_OK")
</pallas_src>

<mosaic_0001>
module attributes {stable_mosaic.version = 11 : i64} {
  func.func @_net_kernel(%arg0: i32, %arg1: memref<8x256xf32, #tpu.memory_space<vmem>>, %arg2: memref<256x256xbf16, #tpu.memory_space<vmem>>, %arg3: memref<1x256xf32, #tpu.memory_space<vmem>>, %arg4: memref<256x256xbf16, #tpu.memory_space<vmem>>, %arg5: memref<1x256xf32, #tpu.memory_space<vmem>>, %arg6: memref<8x128xf32, #tpu.memory_space<vmem>>) attributes {dimension_semantics = [#tpu.dimension_semantics<parallel>], iteration_bounds = array<i64: 1>, scalar_prefetch = 0 : i64, scratch_operands = 0 : i64, tpu.core_type = #tpu.core_type<tc>, window_params = [{transform_indices = @transform_0, window_bounds = array<i64: 8, 256>}, {pipeline_mode = #tpu.pipeline_mode<synchronous>, transform_indices = @transform_1, window_bounds = array<i64: 256, 256>}, {pipeline_mode = #tpu.pipeline_mode<synchronous>, transform_indices = @transform_2, window_bounds = array<i64: 1, 256>}, {pipeline_mode = #tpu.pipeline_mode<synchronous>, transform_indices = @transform_3, window_bounds = array<i64: 256, 256>}, {pipeline_mode = #tpu.pipeline_mode<synchronous>, transform_indices = @transform_4, window_bounds = array<i64: 1, 256>}, {transform_indices = @transform_5, window_bounds = array<i64: 8, 128>}]} {
    %c0 = arith.constant 0 : index
    %c0_0 = arith.constant 0 : index
    %0 = vector.load %arg1[%c0, %c0_0] : memref<8x256xf32, #tpu.memory_space<vmem>>, vector<8x256xf32>
    %cst = arith.constant 0.000000e+00 : f32
    %1 = vector.broadcast %cst : f32 to vector<8x256xf32>
    %c0_1 = arith.constant 0 : index
    %c0_2 = arith.constant 0 : index
    %2 = vector.load %arg2[%c0_1, %c0_2] : memref<256x256xbf16, #tpu.memory_space<vmem>>, vector<256x256xbf16>
    %c0_3 = arith.constant 0 : index
    %c0_4 = arith.constant 0 : index
    %3 = vector.load %arg3[%c0_3, %c0_4] : memref<1x256xf32, #tpu.memory_space<vmem>>, vector<1x256xf32>
    %c0_i32 = arith.constant 0 : i32
    %4 = math.sin %0 : vector<8x256xf32>
    %5 = arith.addf %0, %1 : vector<8x256xf32>
    %6 = vector.broadcast %3 : vector<1x256xf32> to vector<8x256xf32>
    %7 = arith.addf %1, %6 : vector<8x256xf32>
    %8 = arith.truncf %4 : vector<8x256xf32> to vector<8x256xbf16>
    %cst_5 = arith.constant dense<0.000000e+00> : vector<8x256xf32>
    %9 = tpu.matmul %8, %2, %cst_5 {dimension_numbers = #tpu.dot_dimension_numbers<[1], [0], [0], [1], [0, 0, 1, 1], [], []>} : vector<8x256xbf16>, vector<256x256xbf16>, vector<8x256xf32> -> vector<8x256xf32>
    %10 = arith.addf %7, %9 : vector<8x256xf32>
    %c1_i32 = arith.constant 1 : i32
    %11 = math.sin %5 : vector<8x256xf32>
    %12 = arith.addf %5, %10 : vector<8x256xf32>
    %13 = vector.broadcast %3 : vector<1x256xf32> to vector<8x256xf32>
    %14 = arith.addf %10, %13 : vector<8x256xf32>
    %15 = arith.truncf %11 : vector<8x256xf32> to vector<8x256xbf16>
    %cst_6 = arith.constant dense<0.000000e+00> : vector<8x256xf32>
    %16 = tpu.matmul %15, %2, %cst_6 {dimension_numbers = #tpu.dot_dimension_numbers<[1], [0], [0], [1], [0, 0, 1, 1], [], []>} : vector<8x256xbf16>, vector<256x256xbf16>, vector<8x256xf32> -> vector<8x256xf32>
    %17 = arith.addf %14, %16 : vector<8x256xf32>
    %c2_i32 = arith.constant 2 : i32
    %18 = math.sin %12 : vector<8x256xf32>
    %19 = arith.addf %12, %17 : vector<8x256xf32>
    %20 = vector.broadcast %3 : vector<1x256xf32> to vector<8x256xf32>
    %21 = arith.addf %17, %20 : vector<8x256xf32>
    %22 = arith.truncf %18 : vector<8x256xf32> to vector<8x256xbf16>
    %cst_7 = arith.constant dense<0.000000e+00> : vector<8x256xf32>
    %23 = tpu.matmul %22, %2, %cst_7 {dimension_numbers = #tpu.dot_dimension_numbers<[1], [0], [0], [1], [0, 0, 1, 1], [], []>} : vector<8x256xbf16>, vector<256x256xbf16>, vector<8x256xf32> -> vector<8x256xf32>
    %24 = arith.addf %21, %23 : vector<8x256xf32>
    %c3_i32 = arith.constant 3 : i32
    %25 = math.sin %19 : vector<8x256xf32>
    %26 = arith.addf %19, %24 : vector<8x256xf32>
    %27 = vector.broadcast %3 : vector<1x256xf32> to vector<8x256xf32>
    %28 = arith.addf %24, %27 : vector<8x256xf32>
    %29 = arith.truncf %25 : vector<8x256xf32> to vector<8x256xbf16>
    %cst_8 = arith.constant dense<0.000000e+00> : vector<8x256xf32>
    %30 = tpu.matmul %29, %2, %cst_8 {dimension_numbers = #tpu.dot_dimension_numbers<[1], [0], [0], [1], [0, 0, 1, 1], [], []>} : vector<8x256xbf16>, vector<256x256xbf16>, vector<8x256xf32> -> vector<8x256xf32>
    %31 = arith.addf %28, %30 : vector<8x256xf32>
    %c4_i32 = arith.constant 4 : i32
    %32 = math.sin %26 : vector<8x256xf32>
    %33 = arith.addf %26, %31 : vector<8x256xf32>
    %34 = vector.broadcast %3 : vector<1x256xf32> to vector<8x256xf32>
    %35 = arith.addf %31, %34 : vector<8x256xf32>
    %36 = arith.truncf %32 : vector<8x256xf32> to vector<8x256xbf16>
    %cst_9 = arith.constant dense<0.000000e+00> : vector<8x256xf32>
    %37 = tpu.matmul %36, %2, %cst_9 {dimension_numbers = #tpu.dot_dimension_numbers<[1], [0], [0], [1], [0, 0, 1, 1], [], []>} : vector<8x256xbf16>, vector<256x256xbf16>, vector<8x256xf32> -> vector<8x256xf32>
    %38 = arith.addf %35, %37 : vector<8x256xf32>
    %c0_10 = arith.constant 0 : index
    %c0_11 = arith.constant 0 : index
    %39 = vector.load %arg4[%c0_10, %c0_11] : memref<256x256xbf16, #tpu.memory_space<vmem>>, vector<256x256xbf16>
    %c0_12 = arith.constant 0 : index
    %c0_13 = arith.constant 0 : index
    %40 = vector.load %arg5[%c0_12, %c0_13] : memref<1x256xf32, #tpu.memory_space<vmem>>, vector<1x256xf32>
    %c0_i32_14 = arith.constant 0 : i32
    %41 = math.sin %33 : vector<8x256xf32>
    %42 = arith.addf %33, %1 : vector<8x256xf32>
    %43 = vector.broadcast %40 : vector<1x256xf32> to vector<8x256xf32>
    %44 = arith.addf %1, %43 : vector<8x256xf32>
    %45 = arith.truncf %41 : vector<8x256xf32> to vector<8x256xbf16>
    %cst_15 = arith.constant dense<0.000000e+00> : vector<8x256xf32>
    %46 = tpu.matmul %45, %39, %cst_15 {dimension_numbers = #tpu.dot_dimension_numbers<[1], [0], [0], [1], [0, 0, 1, 1], [], []>} : vector<8x256xbf16>, vector<256x256xbf16>, vector<8x256xf32> -> vector<8x256xf32>
    %47 = arith.addf %44, %46 : vector<8x256xf32>
    %c1_i32_16 = arith.constant 1 : i32
    %48 = math.sin %42 : vector<8x256xf32>
    %49 = arith.addf %42, %47 : vector<8x256xf32>
    %50 = vector.broadcast %40 : vector<1x256xf32> to vector<8x256xf32>
    %51 = arith.addf %47, %50 : vector<8x256xf32>
    %52 = arith.truncf %48 : vector<8x256xf32> to vector<8x256xbf16>
    %cst_17 = arith.constant dense<0.000000e+00> : vector<8x256xf32>
    %53 = tpu.matmul %52, %39, %cst_17 {dimension_numbers = #tpu.dot_dimension_numbers<[1], [0], [0], [1], [0, 0, 1, 1], [], []>} : vector<8x256xbf16>, vector<256x256xbf16>, vector<8x256xf32> -> vector<8x256xf32>
    %54 = arith.addf %51, %53 : vector<8x256xf32>
    %c2_i32_18 = arith.constant 2 : i32
    %55 = math.sin %49 : vector<8x256xf32>
    %56 = arith.addf %49, %54 : vector<8x256xf32>
    %57 = vector.broadcast %40 : vector<1x256xf32> to vector<8x256xf32>
    %58 = arith.addf %54, %57 : vector<8x256xf32>
    %59 = arith.truncf %55 : vector<8x256xf32> to vector<8x256xbf16>
    %cst_19 = arith.constant dense<0.000000e+00> : vector<8x256xf32>
    %60 = tpu.matmul %59, %39, %cst_19 {dimension_numbers = #tpu.dot_dimension_numbers<[1], [0], [0], [1], [0, 0, 1, 1], [], []>} : vector<8x256xbf16>, vector<256x256xbf16>, vector<8x256xf32> -> vector<8x256xf32>
    %61 = arith.addf %58, %60 : vector<8x256xf32>
    %c3_i32_20 = arith.constant 3 : i32
    %62 = math.sin %56 : vector<8x256xf32>
    %63 = arith.addf %56, %61 : vector<8x256xf32>
    %64 = vector.broadcast %40 : vector<1x256xf32> to vector<8x256xf32>
    %65 = arith.addf %61, %64 : vector<8x256xf32>
    %66 = arith.truncf %62 : vector<8x256xf32> to vector<8x256xbf16>
    %cst_21 = arith.constant dense<0.000000e+00> : vector<8x256xf32>
    %67 = tpu.matmul %66, %39, %cst_21 {dimension_numbers = #tpu.dot_dimension_numbers<[1], [0], [0], [1], [0, 0, 1, 1], [], []>} : vector<8x256xbf16>, vector<256x256xbf16>, vector<8x256xf32> -> vector<8x256xf32>
    %68 = arith.addf %65, %67 : vector<8x256xf32>
    %c4_i32_22 = arith.constant 4 : i32
    %69 = math.sin %63 : vector<8x256xf32>
    %70 = arith.addf %63, %68 : vector<8x256xf32>
    %71 = vector.broadcast %40 : vector<1x256xf32> to vector<8x256xf32>
    %72 = arith.addf %68, %71 : vector<8x256xf32>
    %73 = arith.truncf %69 : vector<8x256xf32> to vector<8x256xbf16>
    %cst_23 = arith.constant dense<0.000000e+00> : vector<8x256xf32>
    %74 = tpu.matmul %73, %39, %cst_23 {dimension_numbers = #tpu.dot_dimension_numbers<[1], [0], [0], [1], [0, 0, 1, 1], [], []>} : vector<8x256xbf16>, vector<256x256xbf16>, vector<8x256xf32> -> vector<8x256xf32>
    %75 = arith.addf %72, %74 : vector<8x256xf32>
    %76 = vector.extract_strided_slice %70 {offsets = [0, 128], sizes = [8, 128], strides = [1, 1]} : vector<8x256xf32> to vector<8x128xf32>
    %c0_24 = arith.constant 0 : index
    %c0_25 = arith.constant 0 : index
    %77 = vector.load %arg6[%c0_24, %c0_25] : memref<8x128xf32, #tpu.memory_space<vmem>>, vector<8x128xf32>
    tpu.vector_store %arg6[%c0_24, %c0_25], %76 {strides = array<i32>} : memref<8x128xf32, #tpu.memory_space<vmem>>, vector<8x128xf32>,
    return
  }
  func.func @transform_0(%arg0: i32) -> (i32, i32) {
    %c0_i32 = arith.constant 0 : i32
    %c0_i32_0 = arith.constant 0 : i32
    return %arg0, %c0_i32 : i32, i32
  }
  func.func @transform_1(%arg0: i32) -> (i32, i32) {
    %c0_i32 = arith.constant 0 : i32
    %c0_i32_0 = arith.constant 0 : i32
    %c0_i32_1 = arith.constant 0 : i32
    return %c0_i32, %c0_i32_0 : i32, i32
  }
  func.func @transform_2(%arg0: i32) -> (i32, i32) {
    %c0_i32 = arith.constant 0 : i32
    %c0_i32_0 = arith.constant 0 : i32
    %c0_i32_1 = arith.constant 0 : i32
    return %c0_i32, %c0_i32_0 : i32, i32
  }
  func.func @transform_3(%arg0: i32) -> (i32, i32) {
    %c0_i32 = arith.constant 0 : i32
    %c0_i32_0 = arith.constant 0 : i32
    %c0_i32_1 = arith.constant 0 : i32
    return %c0_i32, %c0_i32_0 : i32, i32
  }
  func.func @transform_4(%arg0: i32) -> (i32, i32) {
    %c0_i32 = arith.constant 0 : i32
    %c0_i32_0 = arith.constant 0 : i32
    %c0_i32_1 = arith.constant 0 : i32
    return %c0_i32, %c0_i32_0 : i32, i32
  }
  func.func @transform_5(%arg0: i32) -> (i32, i32) {
    %c0_i32 = arith.constant 0 : i32
    %c0_i32_0 = arith.constant 0 : i32
    return %arg0, %c0_i32 : i32, i32
  }
}

</mosaic_0001>

<llo_original>
// kernel: net_forward.1
$region0: #{net_forward.1}
  #allocation0 [shape = 'u32[]', space=smem, size = 0x4, offset = 0x4, fixed_abs, tag = 'smem constant byte address 0x4 - core index']
  #allocation1 [shape = 'u32[144,128]{1,0:T(1,128)}', space=vmem, size = 0x12000, scoped, tag = 'internal scratch']
  %s0 = inlined_call_operand.vmem [shape: f32[8,256], index: 0, kind: input, shape index: {}]
  %s1 = inlined_call_operand.hbm [shape: bf16[256,256], index: 1, kind: input, shape index: {}]
  %s2 = inlined_call_operand.vmem [shape: f32[1,256], index: 2, kind: input, shape index: {}]
  %s3 = inlined_call_operand.hbm [shape: bf16[256,256], index: 3, kind: input, shape index: {}]
  %s4 = inlined_call_operand.vmem [shape: f32[1,256], index: 4, kind: input, shape index: {}]
  %s5 = inlined_call_operand.vmem [shape: f32[8,128], index: 5, kind: output, shape index: {}]
  %s6 = sld [smem:[#allocation0]]
  $region38: #{net_forward.1} parent=0
    _
  %s8 = ssub.s32 1, %s6
  %s9 = scalar_select 0, %s8, %s6
  $region1: #{net_forward.1} parent=0
    #allocation2 [shape = 'u8[131072]{0}', space=vmem, size = 0x20000, scoped, tag = 'input window, operand 1, single buffered']
    #allocation3 [shape = 's32[1]{0}', space=sflag, size = 0x4, scoped, tag = 'scoped memory for net_forward.1']
    #allocation4 [shape = 'u8[131072]{0}', space=vmem, size = 0x20000, scoped, tag = 'input window, operand 3, single buffered']
    #allocation5 [shape = 's32[1]{0}', space=sflag, size = 0x4, scoped, tag = 'scoped memory for net_forward.1']
    %10 = vsyncpa [#allocation3], 0
    %11 = vsyncpa [#allocation5], 0
    // Predicated region
    $region2: #{net_forward.1} parent=1 // pred_check
      _
    $region3: #{net_forward.1} parent=1 // pred_check_branch
      %13 = sbr.rel (0) target = $region5
    $region4: #{net_forward.1} parent=1 // pred_region
      _
    $region5: #{net_forward.1} parent=1 // pred_fallthru
      _
    // Predicated region
    $region6: #{net_forward.1} parent=1 // pred_check
      _
    $region7: #{net_forward.1} parent=1 // pred_check_branch
      %15 = sbr.rel (0) target = $region9
    $region8: #{net_forward.1} parent=1 // pred_region
      %s17 = ssub.s32 4096, 4096
      %18 = vsyncadd [#allocation3], %s17
      %s19 = sshll.u32 [#allocation2], 4
      %s20 = int_to_ptr.vmem [resolvable:$true] %s19
      %25 = dma.hbm_to_vmem [thread:$0]  %s1, 4096, %s20, [#allocation3], 128, 128, 8
    $region9: #{net_forward.1} parent=1 // pred_fallthru
      _
    // Predicated region
    $region10: #{net_forward.1} parent=1 // pred_check
      _
    $region11: #{net_forward.1} parent=1 // pred_check_branch
      %27 = sbr.rel (0) target = $region13
    $region12: #{net_forward.1} parent=1 // pred_region
      _
    $region13: #{net_forward.1} parent=1 // pred_fallthru
      _
    // Predicated region
    $region14: #{net_forward.1} parent=1 // pred_check
      _
    $region15: #{net_forward.1} parent=1 // pred_check_branch
      %29 = sbr.rel (0) target = $region17
    $region16: #{net_forward.1} parent=1 // pred_region
      %s31 = ssub.s32 4096, 4096
      %32 = vsyncadd [#allocation5], %s31
      %s33 = sshll.u32 [#allocation4], 4
      %s34 = int_to_ptr.vmem [resolvable:$true] %s33
      %39 = dma.hbm_to_vmem [thread:$0]  %s3, 4096, %s34, [#allocation5], 128, 128, 8
    $region17: #{net_forward.1} parent=1 // pred_fallthru
      _
    // Predicated region
    $region18: #{net_forward.1} parent=1 // pred_check
      _
    $region19: #{net_forward.1} parent=1 // pred_check_branch
      %41 = sbr.rel (0) target = $region21
    $region20: #{net_forward.1} parent=1 // pred_region
      _
    $region21: #{net_forward.1} parent=1 // pred_fallthru
      _
    // Predicated region
    $region22: #{net_forward.1} parent=1 // pred_check
      _
    $region23: #{net_forward.1} parent=1 // pred_check_branch
      %43 = sbr.rel (0) target = $region25
    $region24: #{net_forward.1} parent=1 // pred_region
      %44 = dma.done [#allocation3], 4096
    $region25: #{net_forward.1} parent=1 // pred_fallthru
      _
    // Predicated region
    $region26: #{net_forward.1} parent=1 // pred_check
      _
    $region27: #{net_forward.1} parent=1 // pred_check_branch
      %46 = sbr.rel (0) target = $region29
    $region28: #{net_forward.1} parent=1 // pred_region
      %47 = dma.done [#allocation5], 4096
    $region29: #{net_forward.1} parent=1 // pred_fallthru
      _
    %v48 = vld [vmem:[%s0] sm:$0xff]
    %v49 = vld [vmem:[%s0 + $0x8] sm:$0xff]
    %v50 = vld [vmem:[#allocation2] sm:$0xff]
    %v51 = vld [vmem:[#allocation2 + $0x8] sm:$0xff]
    %v52 = vld [vmem:[#allocation2 + $0x10] sm:$0xff]
    %v53 = vld [vmem:[#allocation2 + $0x18] sm:$0xff]
    %v54 = vld [vmem:[#allocation2 + $0x20] sm:$0xff]
    %v55 = vld [vmem:[#allocation2 + $0x28] sm:$0xff]
    %v56 = vld [vmem:[#allocation2 + $0x30] sm:$0xff]
    %v57 = vld [vmem:[#allocation2 + $0x38] sm:$0xff]
    %v58 = vld [vmem:[#allocation2 + $0x40] sm:$0xff]
    %v59 = vld [vmem:[#allocation2 + $0x48] sm:$0xff]
    %v60 = vld [vmem:[#allocation2 + $0x50] sm:$0xff]
    %v61 = vld [vmem:[#allocation2 + $0x58] sm:$0xff]
    %v62 = vld [vmem:[#allocation2 + $0x60] sm:$0xff]
    %v63 = vld [vmem:[#allocation2 + $0x68] sm:$0xff]
    %v64 = vld [vmem:[#allocation2 + $0x70] sm:$0xff]
    %v65 = vld [vmem:[#allocation2 + $0x78] sm:$0xff]
    %v66 = vld [vmem:[#allocation2 + $0x80] sm:$0xff]
    %v67 = vld [vmem:[#allocation2 + $0x88] sm:$0xff]
    %v68 = vld [vmem:[#allocation2 + $0x90] sm:$0xff]
    %v69 = vld [vmem:[#allocation2 + $0x98] sm:$0xff]
    %v70 = vld [vmem:[#allocation2 + $0xa0] sm:$0xff]
    %v71 = vld [vmem:[#allocation2 + $0xa8] sm:$0xff]
    %v72 = vld [vmem:[#allocation2 + $0xb0] sm:$0xff]
    %v73 = vld [vmem:[#allocation2 + $0xb8] sm:$0xff]
    %v74 = vld [vmem:[#allocation2 + $0xc0] sm:$0xff]
    %v75 = vld [vmem:[#allocation2 + $0xc8] sm:$0xff]
    %v76 = vld [vmem:[#allocation2 + $0xd0] sm:$0xff]
    %v77 = vld [vmem:[#allocation2 + $0xd8] sm:$0xff]
    %v78 = vld [vmem:[#allocation2 + $0xe0] sm:$0xff]
    %v79 = vld [vmem:[#allocation2 + $0xe8] sm:$0xff]
    %v80 = vld [vmem:[#allocation2 + $0xf0] sm:$0xff]
    %v81 = vld [vmem:[#allocation2 + $0xf8] sm:$0xff]
    %v82 = vld [vmem:[%s2] sm:$0x3]
    %v83 = vand.u32 2147483647, %v48
    %vm84 = vcmp.le.f32.partialorder %v83, 0.7853982
    %vm85 = vcmp.lt.s32.totalorder %v48, 0
    %v86 = vand.u32 %v48, 2139095040
    %v87 = vshrl.u32 %v86, 23
    %v88 = vsub.s32 %v87, 127
    %v89 = vand.u32 2147483647, %v48
    %v90 = vand.u32 %v89, 8388607
    %v91 = vor.u32 %v90, 8388608
    %v92 = vsub.s32 0, %v91
    %v93 = vadd.s32 %v88, 1
    %vm94 = vcmp.gt.s32.totalorder %v93, 0
    %v95 = vsel %vm94, %v93, 0
    %v96 = vshrl.u32 %v95, 5
    %v97 = vand.u32 %v95, 31
    %v98 = vsub.s32 32, %v97
    %v99 = vshrl.u32 683565275, %v98
    %v100 = vshll.u32 683565275, %v97
    %v101 = vshrl.u32 2475754826, %v98
    %v102 = vor.u32 %v100, %v101
    %v103 = vshll.u32 2475754826, %v97
    %v104 = vshrl.u32 2131351028, %v98
    %v105 = vor.u32 %v103, %v104
    %v106 = vshll.u32 2131351028, %v97
    %v107 = vshrl.u32 2102212464, %v98
    %v108 = vor.u32 %v106, %v107
    %v109 = vshll.u32 2102212464, %v97
    %v110 = vshrl.u32 920167782, %v98
    %v111 = vor.u32 %v109, %v110
    %v112 = vshll.u32 920167782, %v97
    %v113 = vshrl.u32 1326507024, %v98
    %v114 = vor.u32 %v112, %v113
    %vm115 = vcmp.lt.s32.totalorder %v96, 1
    %vm116 = vcmp.lt.s32.totalorder %v96, 2
    %vm117 = vcmp.lt.s32.totalorder %v96, 3
    %vm118 = vcmp.lt.s32.totalorder %v96, 4
    %v119 = vsel %vm115, %v99, %v102
    %v120 = vsel %vm118, %v108, 2102212464
    %v121 = vsel %vm117, %v105, %v120
    %v122 = vsel %vm116, %v119, %v121
    %v123 = vsel %vm115, %v102, %v105
    %v124 = vsel %vm118, %v111, 920167782
    %v125 = vsel %vm117, %v108, %v124
    %v126 = vsel %vm116, %v123, %v125
    %v127 = vsel %vm115, %v105, %v108
    %v128 = vsel %vm118, %v114, 1326507024
    %v129 = vsel %vm117, %v111, %v128
    %v130 = vsel %vm116, %v127, %v129
    %v131 = vshll.u32 %v91, 8
    %v132 = vmul.u32.u64.compose %v131, %v130
    %v133 = vextract.low.u32 %v132
    %v134 = vextract.high.u32 %v132
    %v135 = vmul.u32.u64.compose %v131, %v126
    %v136 = vextract.low.u32 %v135
    %v137 = vextract.high.u32 %v135
    %v138 = vmul.u32 %v131, %v122
    %v139 = vadd.s32 %v134, %v136
    %vm140 = vc.u32 %v134, %v136
    %v141 = vadd.s32 %v137, 1
    %v142 = vsel %vm140, %v141, %v137
    %v143 = vadd.s32 %v138, %v142
    %v144 = vadd.s32 %v143, 536870912
    %v145 = vshrl.u32 %v144, 30
    %v146 = vshll.u32 %v145, 30
    %v147 = vsub.s32 %v143, %v146
    %vm148 = vcmp.lt.s32.totalorder %v147, 0
    %v149 = vsub.s32 0, %v147
    %v150 = vsel %vm148, %v149, %v147
    %v151 = vclz %v150
    %v152 = vsub.s32 %v151, 2
    %vm153 = vcmp.gt.s32.totalorder 0, %v152
    %v154 = vsel %vm153, 0, %v152
    %v155 = vsub.s32 32, %v154
    %v156 = vshll.u32 %v147, %v154
    %v157 = vshrl.u32 %v139, %v155
    %v158 = vor.u32 %v156, %v157
    %v159 = vsub.s32 4294967266, %v154
    %v160 = vadd.s32 %v159, 127
    %v161 = vshll.u32 %v160, 23
    %v162 = vor.u32 4788187, %v161
    %v163 = vand.u32 2147483647, %v162
    %v165 = vcvt.s32.f32 %v158
    %v166 = vmul.f32 %v165, %v163
    %v167 = vxor.u32 %v166, 2147483648
    %v168 = vsel %vm85, %v167, %v166
    %v169 = vsub.s32 4, %v145
    %v170 = vsel %vm85, %v169, %v145
    %v171 = vsel %vm84, %v48, %v168
    %v172 = vsel %vm84, 0, %v170
    %v173 = vcosq.f32.pop %v171
    %v174 = vsinq.f32.pop %v171
    %vm175 = vweird.f32 %v48
    %v176 = vadd.s32 %v172, 3
    %v177 = vand.u32 %v176, 3
    %vm178 = vcmp.lt.s32.totalorder %v177, 2
    %vm179 = vcmp.eq.s32.totalorder %v177, 0
    %v180 = vxor.u32 %v174, 2147483648
    %v181 = vsel %vm179, %v173, %v180
    %vm182 = vcmp.eq.s32.totalorder %v177, 2
    %v183 = vxor.u32 %v173, 2147483648
    %v184 = vsel %vm182, %v183, %v174
    %v185 = vsel %vm178, %v181, %v184
    %v186 = vsel %vm175, nan, %v185
    %v187 = vand.u32 2147483647, %v49
    %vm188 = vcmp.le.f32.partialorder %v187, 0.7853982
    %vm189 = vcmp.lt.s32.totalorder %v49, 0
    %v190 = vand.u32 %v49, 2139095040
    %v191 = vshrl.u32 %v190, 23
    %v192 = vsub.s32 %v191, 127
    %v193 = vand.u32 2147483647, %v49
    %v194 = vand.u32 %v193, 8388607
    %v195 = vor.u32 %v194, 8388608
    %v196 = vsub.s32 0, %v195
    %v197 = vadd.s32 %v192, 1
    %vm198 = vcmp.gt.s32.totalorder %v197, 0
    %v199 = vsel %vm198, %v197, 0
    %v200 = vshrl.u32 %v199, 5
    %v201 = vand.u32 %v199, 31
    %v202 = vsub.s32 32, %v201
    %v203 = vshrl.u32 683565275, %v202
    %v204 = vshll.u32 683565275, %v201
    %v205 = vshrl.u32 2475754826, %v202
    %v206 = vor.u32 %v204, %v205
    %v207 = vshll.u32 2475754826, %v201
    %v208 = vshrl.u32 2131351028, %v202
    %v209 = vor.u32 %v207, %v208
    %v210 = vshll.u32 2131351028, %v201
    %v211 = vshrl.u32 2102212464, %v202
    %v212 = vor.u32 %v210, %v211
    %v213 = vshll.u32 2102212464, %v201
    %v214 = vshrl.u32 920167782, %v202
    %v215 = vor.u32 %v213, %v214
    %v216 = vshll.u32 920167782, %v201
    %v217 = vshrl.u32 1326507024, %v202
    %v218 = vor.u32 %v216, %v217
    %vm219 = vcmp.lt.s32.totalorder %v200, 1
    %vm220 = vcmp.lt.s32.totalorder %v200, 2
    %vm221 = vcmp.lt.s32.totalorder %v200, 3
    %vm222 = vcmp.lt.s32.totalorder %v200, 4
    %v223 = vsel %vm219, %v203, %v206
    %v224 = vsel %vm222, %v212, 2102212464
    %v225 = vsel %vm221, %v209, %v224
    %v226 = vsel %vm220, %v223, %v225
    %v227 = vsel %vm219, %v206, %v209
    %v228 = vsel %vm222, %v215, 920167782
    %v229 = vsel %vm221, %v212, %v228
    %v230 = vsel %vm220, %v227, %v229
    %v231 = vsel %vm219, %v209, %v212
    %v232 = vsel %vm222, %v218, 1326507024
    %v233 = vsel %vm221, %v215, %v232
    %v234 = vsel %vm220, %v231, %v233
    %v235 = vshll.u32 %v195, 8
    %v236 = vmul.u32.u64.compose %v235, %v234
    %v237 = vextract.low.u32 %v236
    %v238 = vextract.high.u32 %v236
    %v239 = vmul.u32.u64.compose %v235, %v230
    %v240 = vextract.low.u32 %v239
    %v241 = vextract.high.u32 %v239
    %v242 = vmul.u32 %v235, %v226
    %v243 = vadd.s32 %v238, %v240
    %vm244 = vc.u32 %v238, %v240
    %v245 = vadd.s32 %v241, 1
    %v246 = vsel %vm244, %v245, %v241
    %v247 = vadd.s32 %v242, %v246
    %v248 = vadd.s32 %v247, 536870912
    %v249 = vshrl.u32 %v248, 30
    %v250 = vshll.u32 %v249, 30
    %v251 = vsub.s32 %v247, %v250
    %vm252 = vcmp.lt.s32.totalorder %v251, 0
    %v253 = vsub.s32 0, %v251
    %v254 = vsel %vm252, %v253, %v251
    %v255 = vclz %v254
    %v256 = vsub.s32 %v255, 2
    %vm257 = vcmp.gt.s32.totalorder 0, %v256
    %v258 = vsel %vm257, 0, %v256
    %v259 = vsub.s32 32, %v258
    %v260 = vshll.u32 %v251, %v258
    %v261 = vshrl.u32 %v243, %v259
    %v262 = vor.u32 %v260, %v261
    %v263 = vsub.s32 4294967266, %v258
    %v264 = vadd.s32 %v263, 127
    %v265 = vshll.u32 %v264, 23
    %v266 = vor.u32 4788187, %v265
    %v267 = vand.u32 2147483647, %v266
    %v269 = vcvt.s32.f32 %v262
    %v270 = vmul.f32 %v269, %v267
    %v271 = vxor.u32 %v270, 2147483648
    %v272 = vsel %vm189, %v271, %v270
    %v273 = vsub.s32 4, %v249
    %v274 = vsel %vm189, %v273, %v249
    %v275 = vsel %vm188, %v49, %v272
    %v276 = vsel %vm188, 0, %v274
    %v277 = vcosq.f32.pop %v275
    %v278 = vsinq.f32.pop %v275
    %vm279 = vweird.f32 %v49
    %v280 = vadd.s32 %v276, 3
    %v281 = vand.u32 %v280, 3
    %vm282 = vcmp.lt.s32.totalorder %v281, 2
    %vm283 = vcmp.eq.s32.totalorder %v281, 0
    %v284 = vxor.u32 %v278, 2147483648
    %v285 = vsel %vm283, %v277, %v284
    %vm286 = vcmp.eq.s32.totalorder %v281, 2
    %v287 = vxor.u32 %v277, 2147483648
    %v288 = vsel %vm286, %v287, %v278
    %v289 = vsel %vm282, %v285, %v288
    %v290 = vsel %vm279, nan, %v289
    %v291 = vadd.f32 %v48, 0.0
    %v292 = vadd.f32 %v49, 0.0
    %v294 = vlaneseq
    %v295 = vshrl.u32 %v294, 7
    %v296 = vsub.s32 0, %v295
    %v297 = vrot.slane %v82, %v296
    %v298 = vlaneseq
    %v299 = vshrl.u32 %v298, 7
    %v300 = vsub.s32 1, %v299
    %v301 = vrot.slane %v82, %v300
    %v304 = vadd.f32 %v297, 0.0
    %v305 = vadd.f32 %v301, 0.0
    %v306 = vpack.c.bf16 %v186, %v186
    %v307 = vpack.c.bf16 %v290, %v290
    %v340 = vunpack.c.l.b16 %v50
    %v341 = vunpack.c.h.b16 %v50
    %v342 = vunpack.c.l.b16 %v51
    %v343 = vunpack.c.h.b16 %v51
    %v344 = vunpack.c.l.b16 %v52
    %v345 = vunpack.c.h.b16 %v52
    %v346 = vunpack.c.l.b16 %v53
    %v347 = vunpack.c.h.b16 %v53
    %v348 = vunpack.c.l.b16 %v54
    %v349 = vunpack.c.h.b16 %v54
    %v350 = vunpack.c.l.b16 %v55
    %v351 = vunpack.c.h.b16 %v55
    %v352 = vunpack.c.l.b16 %v56
    %v353 = vunpack.c.h.b16 %v56
    %v354 = vunpack.c.l.b16 %v57
    %v355 = vunpack.c.h.b16 %v57
    %v356 = vunpack.c.l.b16 %v58
    %v357 = vunpack.c.h.b16 %v58
    %v358 = vunpack.c.l.b16 %v59
    %v359 = vunpack.c.h.b16 %v59
    %v360 = vunpack.c.l.b16 %v60
    %v361 = vunpack.c.h.b16 %v60
    %v362 = vunpack.c.l.b16 %v61
    %v363 = vunpack.c.h.b16 %v61
    %v364 = vunpack.c.l.b16 %v62
    %v365 = vunpack.c.h.b16 %v62
    %v366 = vunpack.c.l.b16 %v63
    %v367 = vunpack.c.h.b16 %v63
    %v368 = vunpack.c.l.b16 %v64
    %v369 = vunpack.c.h.b16 %v64
    %v370 = vunpack.c.l.b16 %v65
    %v371 = vunpack.c.h.b16 %v65
    %v372 = vunpack.c.l.b16 %v66
    %v373 = vunpack.c.h.b16 %v66
    %v374 = vunpack.c.l.b16 %v67
    %v375 = vunpack.c.h.b16 %v67
    %v376 = vunpack.c.l.b16 %v68
    %v377 = vunpack.c.h.b16 %v68
    %v378 = vunpack.c.l.b16 %v69
    %v379 = vunpack.c.h.b16 %v69
    %v380 = vunpack.c.l.b16 %v70
    %v381 = vunpack.c.h.b16 %v70
    %v382 = vunpack.c.l.b16 %v71
    %v383 = vunpack.c.h.b16 %v71
    %v384 = vunpack.c.l.b16 %v72
    %v385 = vunpack.c.h.b16 %v72
    %v386 = vunpack.c.l.b16 %v73
    %v387 = vunpack.c.h.b16 %v73
    %v388 = vunpack.c.l.b16 %v74
    %v389 = vunpack.c.h.b16 %v74
    %v390 = vunpack.c.l.b16 %v75
    %v391 = vunpack.c.h.b16 %v75
    %v392 = vunpack.c.l.b16 %v76
    %v393 = vunpack.c.h.b16 %v76
    %v394 = vunpack.c.l.b16 %v77
    %v395 = vunpack.c.h.b16 %v77
    %v396 = vunpack.c.l.b16 %v78
    %v397 = vunpack.c.h.b16 %v78
    %v398 = vunpack.c.l.b16 %v79
    %v399 = vunpack.c.h.b16 %v79
    %v400 = vunpack.c.l.b16 %v80
    %v401 = vunpack.c.h.b16 %v80
    %v402 = vunpack.c.l.b16 %v81
    %v403 = vunpack.c.h.b16 %v81
    %v404 = vpack.c.b16 %v342, %v340
    %v405 = vpack.c.b16 %v343, %v341
    %v406 = vpack.c.b16 %v346, %v344
    %v407 = vpack.c.b16 %v347, %v345
    %v408 = vpack.c.b16 %v350, %v348
    %v409 = vpack.c.b16 %v351, %v349
    %v410 = vpack.c.b16 %v354, %v352
    %v411 = vpack.c.b16 %v355, %v353
    %v412 = vpack.c.b16 %v358, %v356
    %v413 = vpack.c.b16 %v359, %v357
    %v414 = vpack.c.b16 %v362, %v360
    %v415 = vpack.c.b16 %v363, %v361
    %v416 = vpack.c.b16 %v366, %v364
    %v417 = vpack.c.b16 %v367, %v365
    %v418 = vpack.c.b16 %v370, %v368
    %v419 = vpack.c.b16 %v371, %v369
    %v420 = vpack.c.b16 %v374, %v372
    %v421 = vpack.c.b16 %v375, %v373
    %v422 = vpack.c.b16 %v378, %v376
    %v423 = vpack.c.b16 %v379, %v377
    %v424 = vpack.c.b16 %v382, %v380
    %v425 = vpack.c.b16 %v383, %v381
    %v426 = vpack.c.b16 %v386, %v384
    %v427 = vpack.c.b16 %v387, %v385
    %v428 = vpack.c.b16 %v390, %v388
    %v429 = vpack.c.b16 %v391, %v389
    %v430 = vpack.c.b16 %v394, %v392
    %v431 = vpack.c.b16 %v395, %v393
    %v432 = vpack.c.b16 %v398, %v396
    %v433 = vpack.c.b16 %v399, %v397
    %v434 = vpack.c.b16 %v402, %v400
    %v435 = vpack.c.b16 %v403, %v401
    %468 = vmatprep.subr.bf16.mxu0 %v419
    %469 = vmatpush1.bf16.msra.mxu0 %v418
    %470 = vmatprep.subr.bf16.mxu0 %v417
    %471 = vmatpush1.bf16.msra.mxu0 %v416
    %472 = vmatprep.subr.bf16.mxu0 %v415
    %473 = vmatpush1.bf16.msra.mxu0 %v414
    %474 = vmatprep.subr.bf16.mxu0 %v413
    %475 = vmatpush1.bf16.msra.mxu0 %v412
    %476 = vmatprep.subr.bf16.mxu0 %v411
    %477 = vmatpush1.bf16.msra.mxu0 %v410
    %478 = vmatprep.subr.bf16.mxu0 %v409
    %479 = vmatpush1.bf16.msra.mxu0 %v408
    %480 = vmatprep.subr.bf16.mxu0 %v407
    %481 = vmatpush1.bf16.msra.mxu0 %v406
    %482 = vmatprep.subr.bf16.mxu0 %v405
    %483 = vmatpush1.bf16.msra.mxu0 %v404
    %484 = vmatprep.subr.bf16.mxu0 %v435
    %485 = vmatpush2.bf16.msra.mxu0 %v434
    %486 = vmatprep.subr.bf16.mxu0 %v433
    %487 = vmatpush2.bf16.msra.mxu0 %v432
    %488 = vmatprep.subr.bf16.mxu0 %v431
    %489 = vmatpush2.bf16.msra.mxu0 %v430
    %490 = vmatprep.subr.bf16.mxu0 %v429
    %491 = vmatpush2.bf16.msra.mxu0 %v428
    %492 = vmatprep.subr.bf16.mxu0 %v427
    %493 = vmatpush2.bf16.msra.mxu0 %v426
    %494 = vmatprep.subr.bf16.mxu0 %v425
    %495 = vmatpush2.bf16.msra.mxu0 %v424
    %496 = vmatprep.subr.bf16.mxu0 %v423
    %497 = vmatpush2.bf16.msra.mxu0 %v422
    %498 = vmatprep.subr.bf16.mxu0 %v421
    %499 = vmatpush2.bf16.msra.mxu0 %v420
    %500 = vmatprep.mubr.bf16.mxu0 %v307
    %501 = vmatmul.mubr.bf16.gmra.mxu0 %v306
    %v502 = vpop.f32.mrf.mxu0
    %v503 = vadd.f32 0.0, %v502
    %v504 = vpop.f32.mrf.mxu0
    %v505 = vadd.f32 0.0, %v504
    %v506 = vpop.f32.mrf.mxu0
    %v507 = vpop.f32.mrf.mxu0
    %508 = vdwg.mxu0
    %v509 = vadd.f32 %v304, %v503
    %v510 = vadd.f32 %v305, %v505
    %v511 = vand.u32 2147483647, %v291
    %vm512 = vcmp.le.f32.partialorder %v511, 0.7853982
    %vm513 = vcmp.lt.s32.totalorder %v291, 0
    %v514 = vand.u32 %v291, 2139095040
    %v515 = vshrl.u32 %v514, 23
    %v516 = vsub.s32 %v515, 127
    %v517 = vand.u32 2147483647, %v291
    %v518 = vand.u32 %v517, 8388607
    %v519 = vor.u32 %v518, 8388608
    %v520 = vsub.s32 0, %v519
    %v521 = vadd.s32 %v516, 1
    %vm522 = vcmp.gt.s32.totalorder %v521, 0
    %v523 = vsel %vm522, %v521, 0
    %v524 = vshrl.u32 %v523, 5
    %v525 = vand.u32 %v523, 31
    %v526 = vsub.s32 32, %v525
    %v527 = vshrl.u32 683565275, %v526
    %v528 = vshll.u32 683565275, %v525
    %v529 = vshrl.u32 2475754826, %v526
    %v530 = vor.u32 %v528, %v529
    %v531 = vshll.u32 2475754826, %v525
    %v532 = vshrl.u32 2131351028, %v526
    %v533 = vor.u32 %v531, %v532
    %v534 = vshll.u32 2131351028, %v525
    %v535 = vshrl.u32 2102212464, %v526
    %v536 = vor.u32 %v534, %v535
    %v537 = vshll.u32 2102212464, %v525
    %v538 = vshrl.u32 920167782, %v526
    %v539 = vor.u32 %v537, %v538
    %v540 = vshll.u32 920167782, %v525
    %v541 = vshrl.u32 1326507024, %v526
    %v542 = vor.u32 %v540, %v541
    %vm543 = vcmp.lt.s32.totalorder %v524, 1
    %vm544 = vcmp.lt.s32.totalorder %v524, 2
    %vm545 = vcmp.lt.s32.totalorder %v524, 3
    %vm546 = vcmp.lt.s32.totalorder %v524, 4
    %v547 = vsel %vm543, %v527, %v530
    %v548 = vsel %vm546, %v536, 2102212464
    %v549 = vsel %vm545, %v533, %v548
    %v550 = vsel %vm544, %v547, %v549
    %v551 = vsel %vm543, %v530, %v533
    %v552 = vsel %vm546, %v539, 920167782
    %v553 = vsel %vm545, %v536, %v552
    %v554 = vsel %vm544, %v551, %v553
    %v555 = vsel %vm543, %v533, %v536
    %v556 = vsel %vm546, %v542, 1326507024
    %v557 = vsel %vm545, %v539, %v556
    %v558 = vsel %vm544, %v555, %v557
    %v559 = vshll.u32 %v519, 8
    %v560 = vmul.u32.u64.compose %v559, %v558
    %v561 = vextract.low.u32 %v560
    %v562 = vextract.high.u32 %v560
    %v563 = vmul.u32.u64.compose %v559, %v554
    %v564 = vextract.low.u32 %v563
    %v565 = vextract.high.u32 %v563
    %v566 = vmul.u32 %v559, %v550
    %v567 = vadd.s32 %v562, %v564
    %vm568 = vc.u32 %v562, %v564
    %v569 = vadd.s32 %v565, 1
    %v570 = vsel %vm568, %v569, %v565
    %v571 = vadd.s32 %v566, %v570
    %v572 = vadd.s32 %v571, 536870912
    %v573 = vshrl.u32 %v572, 30
    %v574 = vshll.u32 %v573, 30
    %v575 = vsub.s32 %v571, %v574
    %vm576 = vcmp.lt.s32.totalorder %v575, 0
    %v577 = vsub.s32 0, %v575
    %v578 = vsel %vm576, %v577, %v575
    %v579 = vclz %v578
    %v580 = vsub.s32 %v579, 2
    %vm581 = vcmp.gt.s32.totalorder 0, %v580
    %v582 = vsel %vm581, 0, %v580
    %v583 = vsub.s32 32, %v582
    %v584 = vshll.u32 %v575, %v582
    %v585 = vshrl.u32 %v567, %v583
    %v586 = vor.u32 %v584, %v585
    %v587 = vsub.s32 4294967266, %v582
    %v588 = vadd.s32 %v587, 127
    %v589 = vshll.u32 %v588, 23
    %v590 = vor.u32 4788187, %v589
    %v591 = vand.u32 2147483647, %v590
    %v593 = vcvt.s32.f32 %v586
    %v594 = vmul.f32 %v593, %v591
    %v595 = vxor.u32 %v594, 2147483648
    %v596 = vsel %vm513, %v595, %v594
    %v597 = vsub.s32 4, %v573
    %v598 = vsel %vm513, %v597, %v573
    %v599 = vsel %vm512, %v291, %v596
    %v600 = vsel %vm512, 0, %v598
    %v601 = vcosq.f32.pop %v599
    %v602 = vsinq.f32.pop %v599
    %vm603 = vweird.f32 %v291
    %v604 = vadd.s32 %v600, 3
    %v605 = vand.u32 %v604, 3
    %vm606 = vcmp.lt.s32.totalorder %v605, 2
    %vm607 = vcmp.eq.s32.totalorder %v605, 0
    %v608 = vxor.u32 %v602, 2147483648
    %v609 = vsel %vm607, %v601, %v608
    %vm610 = vcmp.eq.s32.totalorder %v605, 2
    %v611 = vxor.u32 %v601, 2147483648
    %v612 = vsel %vm610, %v611, %v602
    %v613 = vsel %vm606, %v609, %v612
    %v614 = vsel %vm603, nan, %v613
    %v615 = vand.u32 2147483647, %v292
    %vm616 = vcmp.le.f32.partialorder %v615, 0.7853982
    %vm617 = vcmp.lt.s32.totalorder %v292, 0
    %v618 = vand.u32 %v292, 2139095040
    %v619 = vshrl.u32 %v618, 23
    %v620 = vsub.s32 %v619, 127
    %v621 = vand.u32 2147483647, %v292
    %v622 = vand.u32 %v621, 8388607
    %v623 = vor.u32 %v622, 8388608
    %v624 = vsub.s32 0, %v623
    %v625 = vadd.s32 %v620, 1
    %vm626 = vcmp.gt.s32.totalorder %v625, 0
    %v627 = vsel %vm626, %v625, 0
    %v628 = vshrl.u32 %v627, 5
    %v629 = vand.u32 %v627, 31
    %v630 = vsub.s32 32, %v629
    %v631 = vshrl.u32 683565275, %v630
    %v632 = vshll.u32 683565275, %v629
    %v633 = vshrl.u32 2475754826, %v630
    %v634 = vor.u32 %v632, %v633
    %v635 = vshll.u32 2475754826, %v629
    %v636 = vshrl.u32 2131351028, %v630
    %v637 = vor.u32 %v635, %v636
    %v638 = vshll.u32 2131351028, %v629
    %v639 = vshrl.u32 2102212464, %v630
    %v640 = vor.u32 %v638, %v639
    %v641 = vshll.u32 2102212464, %v629
    %v642 = vshrl.u32 920167782, %v630
    %v643 = vor.u32 %v641, %v642
    %v644 = vshll.u32 920167782, %v629
    %v645 = vshrl.u32 1326507024, %v630
    %v646 = vor.u32 %v644, %v645
    %vm647 = vcmp.lt.s32.totalorder %v628, 1
    %vm648 = vcmp.lt.s32.totalorder %v628, 2
    %vm649 = vcmp.lt.s32.totalorder %v628, 3
    %vm650 = vcmp.lt.s32.totalorder %v628, 4
    %v651 = vsel %vm647, %v631, %v634
    %v652 = vsel %vm650, %v640, 2102212464
    %v653 = vsel %vm649, %v637, %v652
    %v654 = vsel %vm648, %v651, %v653
    %v655 = vsel %vm647, %v634, %v637
    %v656 = vsel %vm650, %v643, 920167782
    %v657 = vsel %vm649, %v640, %v656
    %v658 = vsel %vm648, %v655, %v657
    %v659 = vsel %vm647, %v637, %v640
    %v660 = vsel %vm650, %v646, 1326507024
    %v661 = vsel %vm649, %v643, %v660
    %v662 = vsel %vm648, %v659, %v661
    %v663 = vshll.u32 %v623, 8
    %v664 = vmul.u32.u64.compose %v663, %v662
    %v665 = vextract.low.u32 %v664
    %v666 = vextract.high.u32 %v664
    %v667 = vmul.u32.u64.compose %v663, %v658
    %v668 = vextract.low.u32 %v667
    %v669 = vextract.high.u32 %v667
    %v670 = vmul.u32 %v663, %v654
    %v671 = vadd.s32 %v666, %v668
    %vm672 = vc.u32 %v666, %v668
    %v673 = vadd.s32 %v669, 1
    %v674 = vsel %vm672, %v673, %v669
    %v675 = vadd.s32 %v670, %v674
    %v676 = vadd.s32 %v675, 536870912
    %v677 = vshrl.u32 %v676, 30
    %v678 = vshll.u32 %v677, 30
    %v679 = vsub.s32 %v675, %v678
    %vm680 = vcmp.lt.s32.totalorder %v679, 0
    %v681 = vsub.s32 0, %v679
    %v682 = vsel %vm680, %v681, %v679
    %v683 = vclz %v682
    %v684 = vsub.s32 %v683, 2
    %vm685 = vcmp.gt.s32.totalorder 0, %v684
    %v686 = vsel %vm685, 0, %v684
    %v687 = vsub.s32 32, %v686
    %v688 = vshll.u32 %v679, %v686
    %v689 = vshrl.u32 %v671, %v687
    %v690 = vor.u32 %v688, %v689
    %v691 = vsub.s32 4294967266, %v686
    %v692 = vadd.s32 %v691, 127
    %v693 = vshll.u32 %v692, 23
    %v694 = vor.u32 4788187, %v693
    %v695 = vand.u32 2147483647, %v694
    %v697 = vcvt.s32.f32 %v690
    %v698 = vmul.f32 %v697, %v695
    %v699 = vxor.u32 %v698, 2147483648
    %v700 = vsel %vm617, %v699, %v698
    %v701 = vsub.s32 4, %v677
    %v702 = vsel %vm617, %v701, %v677
    %v703 = vsel %vm616, %v292, %v700
    %v704 = vsel %vm616, 0, %v702
    %v705 = vcosq.f32.pop %v703
    %v706 = vsinq.f32.pop %v703
    %vm707 = vweird.f32 %v292
    %v708 = vadd.s32 %v704, 3
    %v709 = vand.u32 %v708, 3
    %vm710 = vcmp.lt.s32.totalorder %v709, 2
    %vm711 = vcmp.eq.s32.totalorder %v709, 0
    %v712 = vxor.u32 %v706, 2147483648
    %v713 = vsel %vm711, %v705, %v712
    %vm714 = vcmp.eq.s32.totalorder %v709, 2
    %v715 = vxor.u32 %v705, 2147483648
    %v716 = vsel %vm714, %v715, %v706
    %v717 = vsel %vm710, %v713, %v716
    %v718 = vsel %vm707, nan, %v717
    %v719 = vadd.f32 %v291, %v509
    %v720 = vadd.f32 %v292, %v510
    %v721 = vadd.f32 %v509, %v297
    %v722 = vadd.f32 %v510, %v301
    %v723 = vpack.c.bf16 %v614, %v614
    %v724 = vpack.c.bf16 %v718, %v718
    %725 = vmatprep.subr.bf16.mxu0 %v419
    %726 = vmatpush1.bf16.msra.mxu0 %v418
    %727 = vmatprep.subr.bf16.mxu0 %v417
    %728 = vmatpush1.bf16.msra.mxu0 %v416
    %729 = vmatprep.subr.bf16.mxu0 %v415
    %730 = vmatpush1.bf16.msra.mxu0 %v414
    %731 = vmatprep.subr.bf16.mxu0 %v413
    %732 = vmatpush1.bf16.msra.mxu0 %v412
    %733 = vmatprep.subr.bf16.mxu0 %v411
    %734 = vmatpush1.bf16.msra.mxu0 %v410
    %735 = vmatprep.subr.bf16.mxu0 %v409
    %736 = vmatpush1.bf16.msra.mxu0 %v408
    %737 = vmatprep.subr.bf16.mxu0 %v407
    %738 = vmatpush1.bf16.msra.mxu0 %v406
    %739 = vmatprep.subr.bf16.mxu0 %v405
    %740 = vmatpush1.bf16.msra.mxu0 %v404
    %741 = vmatprep.subr.bf16.mxu0 %v435
    %742 = vmatpush2.bf16.msra.mxu0 %v434
    %743 = vmatprep.subr.bf16.mxu0 %v433
    %744 = vmatpush2.bf16.msra.mxu0 %v432
    %745 = vmatprep.subr.bf16.mxu0 %v431
    %746 = vmatpush2.bf16.msra.mxu0 %v430
    %747 = vmatprep.subr.bf16.mxu0 %v429
    %748 = vmatpush2.bf16.msra.mxu0 %v428
    %749 = vmatprep.subr.bf16.mxu0 %v427
    %750 = vmatpush2.bf16.msra.mxu0 %v426
    %751 = vmatprep.subr.bf16.mxu0 %v425
    %752 = vmatpush2.bf16.msra.mxu0 %v424
    %753 = vmatprep.subr.bf16.mxu0 %v423
    %754 = vmatpush2.bf16.msra.mxu0 %v422
    %755 = vmatprep.subr.bf16.mxu0 %v421
    %756 = vmatpush2.bf16.msra.mxu0 %v420
    %757 = vmatprep.mubr.bf16.mxu0 %v724
    %758 = vmatmul.mubr.bf16.gmra.mxu0 %v723
    %v759 = vpop.f32.mrf.mxu0
    %v760 = vadd.f32 0.0, %v759
    %v761 = vpop.f32.mrf.mxu0
    %v762 = vadd.f32 0.0, %v761
    %v763 = vpop.f32.mrf.mxu0
    %v764 = vpop.f32.mrf.mxu0
    %765 = vdwg.mxu0
    %v766 = vadd.f32 %v721, %v760
    %v767 = vadd.f32 %v722, %v762
    %v768 = vand.u32 2147483647, %v719
    %vm769 = vcmp.le.f32.partialorder %v768, 0.7853982
    %vm770 = vcmp.lt.s32.totalorder %v719, 0
    %v771 = vand.u32 %v719, 2139095040
    %v772 = vshrl.u32 %v771, 23
    %v773 = vsub.s32 %v772, 127
    %v774 = vand.u32 2147483647, %v719
    %v775 = vand.u32 %v774, 8388607
    %v776 = vor.u32 %v775, 8388608
    %v777 = vsub.s32 0, %v776
    %v778 = vadd.s32 %v773, 1
    %vm779 = vcmp.gt.s32.totalorder %v778, 0
    %v780 = vsel %vm779, %v778, 0
    %v781 = vshrl.u32 %v780, 5
    %v782 = vand.u32 %v780, 31
    %v783 = vsub.s32 32, %v782
    %v784 = vshrl.u32 683565275, %v783
    %v785 = vshll.u32 683565275, %v782
    %v786 = vshrl.u32 2475754826, %v783
    %v787 = vor.u32 %v785, %v786
    %v788 = vshll.u32 2475754826, %v782
    %v789 = vshrl.u32 2131351028, %v783
    %v790 = vor.u32 %v788, %v789
    %v791 = vshll.u32 2131351028, %v782
    %v792 = vshrl.u32 2102212464, %v783
    %v793 = vor.u32 %v791, %v792
    %v794 = vshll.u32 2102212464, %v782
    %v795 = vshrl.u32 920167782, %v783
    %v796 = vor.u32 %v794, %v795
    %v797 = vshll.u32 920167782, %v782
    %v798 = vshrl.u32 1326507024, %v783
    %v799 = vor.u32 %v797, %v798
    %vm800 = vcmp.lt.s32.totalorder %v781, 1
    %vm801 = vcmp.lt.s32.totalorder %v781, 2
    %vm802 = vcmp.lt.s32.totalorder %v781, 3
    %vm803 = vcmp.lt.s32.totalorder %v781, 4
    %v804 = vsel %vm800, %v784, %v787
    %v805 = vsel %vm803, %v793, 2102212464
    %v806 = vsel %vm802, %v790, %v805
    %v807 = vsel %vm801, %v804, %v806
    %v808 = vsel %vm800, %v787, %v790
    %v809 = vsel %vm803, %v796, 920167782
    %v810 = vsel %vm802, %v793, %v809
    %v811 = vsel %vm801, %v808, %v810
    %v812 = vsel %vm800, %v790, %v793
    %v813 = vsel %vm803, %v799, 1326507024
    %v814 = vsel %vm802, %v796, %v813
    %v815 = vsel %vm801, %v812, %v814
    %v816 = vshll.u32 %v776, 8
    %v817 = vmul.u32.u64.compose %v816, %v815
    %v818 = vextract.low.u32 %v817
    %v819 = vextract.high.u32 %v817
    %v820 = vmul.u32.u64.compose %v816, %v811
    %v821 = vextract.low.u32 %v820
    %v822 = vextract.high.u32 %v820
    %v823 = vmul.u32 %v816, %v807
    %v824 = vadd.s32 %v819, %v821
    %vm825 = vc.u32 %v819, %v821
    %v826 = vadd.s32 %v822, 1
    %v827 = vsel %vm825, %v826, %v822
    %v828 = vadd.s32 %v823, %v827
    %v829 = vadd.s32 %v828, 536870912
    %v830 = vshrl.u32 %v829, 30
    %v831 = vshll.u32 %v830, 30
    %v832 = vsub.s32 %v828, %v831
    %vm833 = vcmp.lt.s32.totalorder %v832, 0
    %v834 = vsub.s32 0, %v832
    %v835 = vsel %vm833, %v834, %v832
    %v836 = vclz %v835
    %v837 = vsub.s32 %v836, 2
    %vm838 = vcmp.gt.s32.totalorder 0, %v837
    %v839 = vsel %vm838, 0, %v837
    %v840 = vsub.s32 32, %v839
    %v841 = vshll.u32 %v832, %v839
    %v842 = vshrl.u32 %v824, %v840
    %v843 = vor.u32 %v841, %v842
    %v844 = vsub.s32 4294967266, %v839
    %v845 = vadd.s32 %v844, 127
    %v846 = vshll.u32 %v845, 23
    %v847 = vor.u32 4788187, %v846
    %v848 = vand.u32 2147483647, %v847
    %v850 = vcvt.s32.f32 %v843
    %v851 = vmul.f32 %v850, %v848
    %v852 = vxor.u32 %v851, 2147483648
    %v853 = vsel %vm770, %v852, %v851
    %v854 = vsub.s32 4, %v830
    %v855 = vsel %vm770, %v854, %v830
    %v856 = vsel %vm769, %v719, %v853
    %v857 = vsel %vm769, 0, %v855
    %v858 = vcosq.f32.pop %v856
    %v859 = vsinq.f32.pop %v856
    %vm860 = vweird.f32 %v719
    %v861 = vadd.s32 %v857, 3
    %v862 = vand.u32 %v861, 3
    %vm863 = vcmp.lt.s32.totalorder %v862, 2
    %vm864 = vcmp.eq.s32.totalorder %v862, 0
    %v865 = vxor.u32 %v859, 2147483648
    %v866 = vsel %vm864, %v858, %v865
    %vm867 = vcmp.eq.s32.totalorder %v862, 2
    %v868 = vxor.u32 %v858, 2147483648
    %v869 = vsel %vm867, %v868, %v859
    %v870 = vsel %vm863, %v866, %v869
    %v871 = vsel %vm860, nan, %v870
    %v872 = vand.u32 2147483647, %v720
    %vm873 = vcmp.le.f32.partialorder %v872, 0.7853982
    %vm874 = vcmp.lt.s32.totalorder %v720, 0
    %v875 = vand.u32 %v720, 2139095040
    %v876 = vshrl.u32 %v875, 23
    %v877 = vsub.s32 %v876, 127
    %v878 = vand.u32 2147483647, %v720
    %v879 = vand.u32 %v878, 8388607
    %v880 = vor.u32 %v879, 8388608
    %v881 = vsub.s32 0, %v880
    %v882 = vadd.s32 %v877, 1
    %vm883 = vcmp.gt.s32.totalorder %v882, 0
    %v884 = vsel %vm883, %v882, 0
    %v885 = vshrl.u32 %v884, 5
    %v886 = vand.u32 %v884, 31
    %v887 = vsub.s32 32, %v886
    %v888 = vshrl.u32 683565275, %v887
    %v889 = vshll.u32 683565275, %v886
    %v890 = vshrl.u32 2475754826, %v887
    %v891 = vor.u32 %v889, %v890
    %v892 = vshll.u32 2475754826, %v886
    %v893 = vshrl.u32 2131351028, %v887
    %v894 = vor.u32 %v892, %v893
    %v895 = vshll.u32 2131351028, %v886
    %v896 = vshrl.u32 2102212464, %v887
    %v897 = vor.u32 %v895, %v896
    %v898 = vshll.u32 2102212464, %v886
    %v899 = vshrl.u32 920167782, %v887
    %v900 = vor.u32 %v898, %v899
    %v901 = vshll.u32 920167782, %v886
    %v902 = vshrl.u32 1326507024, %v887
    %v903 = vor.u32 %v901, %v902
    %vm904 = vcmp.lt.s32.totalorder %v885, 1
    %vm905 = vcmp.lt.s32.totalorder %v885, 2
    %vm906 = vcmp.lt.s32.totalorder %v885, 3
    %vm907 = vcmp.lt.s32.totalorder %v885, 4
    %v908 = vsel %vm904, %v888, %v891
    %v909 = vsel %vm907, %v897, 2102212464
    %v910 = vsel %vm906, %v894, %v909
    %v911 = vsel %vm905, %v908, %v910
    %v912 = vsel %vm904, %v891, %v894
    %v913 = vsel %vm907, %v900, 920167782
    %v914 = vsel %vm906, %v897, %v913
    %v915 = vsel %vm905, %v912, %v914
    %v916 = vsel %vm904, %v894, %v897
    %v917 = vsel %vm907, %v903, 1326507024
    %v918 = vsel %vm906, %v900, %v917
    %v919 = vsel %vm905, %v916, %v918
    %v920 = vshll.u32 %v880, 8
    %v921 = vmul.u32.u64.compose %v920, %v919
    %v922 = vextract.low.u32 %v921
    %v923 = vextract.high.u32 %v921
    %v924 = vmul.u32.u64.compose %v920, %v915
    %v925 = vextract.low.u32 %v924
    %v926 = vextract.high.u32 %v924
    %v927 = vmul.u32 %v920, %v911
    %v928 = vadd.s32 %v923, %v925
    %vm929 = vc.u32 %v923, %v925
    %v930 = vadd.s32 %v926, 1
    %v931 = vsel %vm929, %v930, %v926
    %v932 = vadd.s32 %v927, %v931
    %v933 = vadd.s32 %v932, 536870912
    %v934 = vshrl.u32 %v933, 30
    %v935 = vshll.u32 %v934, 30
    %v936 = vsub.s32 %v932, %v935
    %vm937 = vcmp.lt.s32.totalorder %v936, 0
    %v938 = vsub.s32 0, %v936
    %v939 = vsel %vm937, %v938, %v936
    %v940 = vclz %v939
    %v941 = vsub.s32 %v940, 2
    %vm942 = vcmp.gt.s32.totalorder 0, %v941
    %v943 = vsel %vm942, 0, %v941
    %v944 = vsub.s32 32, %v943
    %v945 = vshll.u32 %v936, %v943
    %v946 = vshrl.u32 %v928, %v944
    %v947 = vor.u32 %v945, %v946
    %v948 = vsub.s32 4294967266, %v943
    %v949 = vadd.s32 %v948, 127
    %v950 = vshll.u32 %v949, 23
    %v951 = vor.u32 4788187, %v950
    %v952 = vand.u32 2147483647, %v951
    %v954 = vcvt.s32.f32 %v947
    %v955 = vmul.f32 %v954, %v952
    %v956 = vxor.u32 %v955, 2147483648
    %v957 = vsel %vm874, %v956, %v955
    %v958 = vsub.s32 4, %v934
    %v959 = vsel %vm874, %v958, %v934
    %v960 = vsel %vm873, %v720, %v957
    %v961 = vsel %vm873, 0, %v959
    %v962 = vcosq.f32.pop %v960
    %v963 = vsinq.f32.pop %v960
    %vm964 = vweird.f32 %v720
    %v965 = vadd.s32 %v961, 3
    %v966 = vand.u32 %v965, 3
    %vm967 = vcmp.lt.s32.totalorder %v966, 2
    %vm968 = vcmp.eq.s32.totalorder %v966, 0
    %v969 = vxor.u32 %v963, 2147483648
    %v970 = vsel %vm968, %v962, %v969
    %vm971 = vcmp.eq.s32.totalorder %v966, 2
    %v972 = vxor.u32 %v962, 2147483648
    %v973 = vsel %vm971, %v972, %v963
    %v974 = vsel %vm967, %v970, %v973
    %v975 = vsel %vm964, nan, %v974
    %v976 = vadd.f32 %v719, %v766
    %v977 = vadd.f32 %v720, %v767
    %v978 = vadd.f32 %v766, %v297
    %v979 = vadd.f32 %v767, %v301
    %v980 = vpack.c.bf16 %v871, %v871
    %v981 = vpack.c.bf16 %v975, %v975
    %982 = vmatprep.subr.bf16.mxu0 %v419
    %983 = vmatpush1.bf16.msra.mxu0 %v418
    %984 = vmatprep.subr.bf16.mxu0 %v417
    %985 = vmatpush1.bf16.msra.mxu0 %v416
    %986 = vmatprep.subr.bf16.mxu0 %v415
    %987 = vmatpush1.bf16.msra.mxu0 %v414
    %988 = vmatprep.subr.bf16.mxu0 %v413
    %989 = vmatpush1.bf16.msra.mxu0 %v412
    %990 = vmatprep.subr.bf16.mxu0 %v411
    %991 = vmatpush1.bf16.msra.mxu0 %v410
    %992 = vmatprep.subr.bf16.mxu0 %v409
    %993 = vmatpush1.bf16.msra.mxu0 %v408
    %994 = vmatprep.subr.bf16.mxu0 %v407
    %995 = vmatpush1.bf16.msra.mxu0 %v406
    %996 = vmatprep.subr.bf16.mxu0 %v405
    %997 = vmatpush1.bf16.msra.mxu0 %v404
    %998 = vmatprep.subr.bf16.mxu0 %v435
    %999 = vmatpush2.bf16.msra.mxu0 %v434
    %1000 = vmatprep.subr.bf16.mxu0 %v433
    %1001 = vmatpush2.bf16.msra.mxu0 %v432
    %1002 = vmatprep.subr.bf16.mxu0 %v431
    %1003 = vmatpush2.bf16.msra.mxu0 %v430
    %1004 = vmatprep.subr.bf16.mxu0 %v429
    %1005 = vmatpush2.bf16.msra.mxu0 %v428
    %1006 = vmatprep.subr.bf16.mxu0 %v427
    %1007 = vmatpush2.bf16.msra.mxu0 %v426
    %1008 = vmatprep.subr.bf16.mxu0 %v425
    %1009 = vmatpush2.bf16.msra.mxu0 %v424
    %1010 = vmatprep.subr.bf16.mxu0 %v423
    %1011 = vmatpush2.bf16.msra.mxu0 %v422
    %1012 = vmatprep.subr.bf16.mxu0 %v421
    %1013 = vmatpush2.bf16.msra.mxu0 %v420
    %1014 = vmatprep.mubr.bf16.mxu0 %v981
    %1015 = vmatmul.mubr.bf16.gmra.mxu0 %v980
    %v1016 = vpop.f32.mrf.mxu0
    %v1017 = vadd.f32 0.0, %v1016
    %v1018 = vpop.f32.mrf.mxu0
    %v1019 = vadd.f32 0.0, %v1018
    %v1020 = vpop.f32.mrf.mxu0
    %v1021 = vpop.f32.mrf.mxu0
    %1022 = vdwg.mxu0
    %v1023 = vadd.f32 %v978, %v1017
    %v1024 = vadd.f32 %v979, %v1019
    %v1025 = vand.u32 2147483647, %v976
    %vm1026 = vcmp.le.f32.partialorder %v1025, 0.7853982
    %vm1027 = vcmp.lt.s32.totalorder %v976, 0
    %v1028 = vand.u32 %v976, 2139095040
    %v1029 = vshrl.u32 %v1028, 23
    %v1030 = vsub.s32 %v1029, 127
    %v1031 = vand.u32 2147483647, %v976
    %v1032 = vand.u32 %v1031, 8388607
    %v1033 = vor.u32 %v1032, 8388608
    %v1034 = vsub.s32 0, %v1033
    %v1035 = vadd.s32 %v1030, 1
    %vm1036 = vcmp.gt.s32.totalorder %v1035, 0
    %v1037 = vsel %vm1036, %v1035, 0
    %v1038 = vshrl.u32 %v1037, 5
    %v1039 = vand.u32 %v1037, 31
    %v1040 = vsub.s32 32, %v1039
    %v1041 = vshrl.u32 683565275, %v1040
    %v1042 = vshll.u32 683565275, %v1039
    %v1043 = vshrl.u32 2475754826, %v1040
    %v1044 = vor.u32 %v1042, %v1043
    %v1045 = vshll.u32 2475754826, %v1039
    %v1046 = vshrl.u32 2131351028, %v1040
    %v1047 = vor.u32 %v1045, %v1046
    %v1048 = vshll.u32 2131351028, %v1039
    %v1049 = vshrl.u32 2102212464, %v1040
    %v1050 = vor.u32 %v1048, %v1049
    %v1051 = vshll.u32 2102212464, %v1039
    %v1052 = vshrl.u32 920167782, %v1040
    %v1053 = vor.u32 %v1051, %v1052
    %v1054 = vshll.u32 920167782, %v1039
    %v1055 = vshrl.u32 1326507024, %v1040
    %v1056 = vor.u32 %v1054, %v1055
    %vm1057 = vcmp.lt.s32.totalorder %v1038, 1
    %vm1058 = vcmp.lt.s32.totalorder %v1038, 2
    %vm1059 = vcmp.lt.s32.totalorder %v1038, 3
    %vm1060 = vcmp.lt.s32.totalorder %v1038, 4
    %v1061 = vsel %vm1057, %v1041, %v1044
    %v1062 = vsel %vm1060, %v1050, 2102212464
    %v1063 = vsel %vm1059, %v1047, %v1062
    %v1064 = vsel %vm1058, %v1061, %v1063
    %v1065 = vsel %vm1057, %v1044, %v1047
    %v1066 = vsel %vm1060, %v1053, 920167782
    %v1067 = vsel %vm1059, %v1050, %v1066
    %v1068 = vsel %vm1058, %v1065, %v1067
    %v1069 = vsel %vm1057, %v1047, %v1050
    %v1070 = vsel %vm1060, %v1056, 1326507024
    %v1071 = vsel %vm1059, %v1053, %v1070
    %v1072 = vsel %vm1058, %v1069, %v1071
    %v1073 = vshll.u32 %v1033, 8
    %v1074 = vmul.u32.u64.compose %v1073, %v1072
    %v1075 = vextract.low.u32 %v1074
    %v1076 = vextract.high.u32 %v1074
    %v1077 = vmul.u32.u64.compose %v1073, %v1068
    %v1078 = vextract.low.u32 %v1077
    %v1079 = vextract.high.u32 %v1077
    %v1080 = vmul.u32 %v1073, %v1064
    %v1081 = vadd.s32 %v1076, %v1078
    %vm1082 = vc.u32 %v1076, %v1078
    %v1083 = vadd.s32 %v1079, 1
    %v1084 = vsel %vm1082, %v1083, %v1079
    %v1085 = vadd.s32 %v1080, %v1084
    %v1086 = vadd.s32 %v1085, 536870912
    %v1087 = vshrl.u32 %v1086, 30
    %v1088 = vshll.u32 %v1087, 30
    %v1089 = vsub.s32 %v1085, %v1088
    %vm1090 = vcmp.lt.s32.totalorder %v1089, 0
    %v1091 = vsub.s32 0, %v1089
    %v1092 = vsel %vm1090, %v1091, %v1089
    %v1093 = vclz %v1092
    %v1094 = vsub.s32 %v1093, 2
    %vm1095 = vcmp.gt.s32.totalorder 0, %v1094
    %v1096 = vsel %vm1095, 0, %v1094
    %v1097 = vsub.s32 32, %v1096
    %v1098 = vshll.u32 %v1089, %v1096
    %v1099 = vshrl.u32 %v1081, %v1097
    %v1100 = vor.u32 %v1098, %v1099
    %v1101 = vsub.s32 4294967266, %v1096
    %v1102 = vadd.s32 %v1101, 127
    %v1103 = vshll.u32 %v1102, 23
    %v1104 = vor.u32 4788187, %v1103
    %v1105 = vand.u32 2147483647, %v1104
    %v1107 = vcvt.s32.f32 %v1100
    %v1108 = vmul.f32 %v1107, %v1105
    %v1109 = vxor.u32 %v1108, 2147483648
    %v1110 = vsel %vm1027, %v1109, %v1108
    %v1111 = vsub.s32 4, %v1087
    %v1112 = vsel %vm1027, %v1111, %v1087
    %v1113 = vsel %vm1026, %v976, %v1110
    %v1114 = vsel %vm1026, 0, %v1112
    %v1115 = vcosq.f32.pop %v1113
    %v1116 = vsinq.f32.pop %v1113
    %vm1117 = vweird.f32 %v976
    %v1118 = vadd.s32 %v1114, 3
    %v1119 = vand.u32 %v1118, 3
    %vm1120 = vcmp.lt.s32.totalorder %v1119, 2
    %vm1121 = vcmp.eq.s32.totalorder %v1119, 0
    %v1122 = vxor.u32 %v1116, 2147483648
    %v1123 = vsel %vm1121, %v1115, %v1122
    %vm1124 = vcmp.eq.s32.totalorder %v1119, 2
    %v1125 = vxor.u32 %v1115, 2147483648
    %v1126 = vsel %vm1124, %v1125, %v1116
    %v1127 = vsel %vm1120, %v1123, %v1126
    %v1128 = vsel %vm1117, nan, %v1127
    %v1129 = vand.u32 2147483647, %v977
    %vm1130 = vcmp.le.f32.partialorder %v1129, 0.7853982
    %vm1131 = vcmp.lt.s32.totalorder %v977, 0
    %v1132 = vand.u32 %v977, 2139095040
    %v1133 = vshrl.u32 %v1132, 23
    %v1134 = vsub.s32 %v1133, 127
    %v1135 = vand.u32 2147483647, %v977
    %v1136 = vand.u32 %v1135, 8388607
    %v1137 = vor.u32 %v1136, 8388608
    %v1138 = vsub.s32 0, %v1137
    %v1139 = vadd.s32 %v1134, 1
    %vm1140 = vcmp.gt.s32.totalorder %v1139, 0
    %v1141 = vsel %vm1140, %v1139, 0
    %v1142 = vshrl.u32 %v1141, 5
    %v1143 = vand.u32 %v1141, 31
    %v1144 = vsub.s32 32, %v1143
    %v1145 = vshrl.u32 683565275, %v1144
    %v1146 = vshll.u32 683565275, %v1143
    %v1147 = vshrl.u32 2475754826, %v1144
    %v1148 = vor.u32 %v1146, %v1147
    %v1149 = vshll.u32 2475754826, %v1143
    %v1150 = vshrl.u32 2131351028, %v1144
    %v1151 = vor.u32 %v1149, %v1150
    %v1152 = vshll.u32 2131351028, %v1143
    %v1153 = vshrl.u32 2102212464, %v1144
    %v1154 = vor.u32 %v1152, %v1153
    %v1155 = vshll.u32 2102212464, %v1143
    %v1156 = vshrl.u32 920167782, %v1144
    %v1157 = vor.u32 %v1155, %v1156
    %v1158 = vshll.u32 920167782, %v1143
    %v1159 = vshrl.u32 1326507024, %v1144
    %v1160 = vor.u32 %v1158, %v1159
    %vm1161 = vcmp.lt.s32.totalorder %v1142, 1
    %vm1162 = vcmp.lt.s32.totalorder %v1142, 2
    %vm1163 = vcmp.lt.s32.totalorder %v1142, 3
    %vm1164 = vcmp.lt.s32.totalorder %v1142, 4
    %v1165 = vsel %vm1161, %v1145, %v1148
    %v1166 = vsel %vm1164, %v1154, 2102212464
    %v1167 = vsel %vm1163, %v1151, %v1166
    %v1168 = vsel %vm1162, %v1165, %v1167
    %v1169 = vsel %vm1161, %v1148, %v1151
    %v1170 = vsel %vm1164, %v1157, 920167782
    %v1171 = vsel %vm1163, %v1154, %v1170
    %v1172 = vsel %vm1162, %v1169, %v1171
    %v1173 = vsel %vm1161, %v1151, %v1154
    %v1174 = vsel %vm1164, %v1160, 1326507024
    %v1175 = vsel %vm1163, %v1157, %v1174
    %v1176 = vsel %vm1162, %v1173, %v1175
    %v1177 = vshll.u32 %v1137, 8
    %v1178 = vmul.u32.u64.compose %v1177, %v1176
    %v1179 = vextract.low.u32 %v1178
    %v1180 = vextract.high.u32 %v1178
    %v1181 = vmul.u32.u64.compose %v1177, %v1172
    %v1182 = vextract.low.u32 %v1181
    %v1183 = vextract.high.u32 %v1181
    %v1184 = vmul.u32 %v1177, %v1168
    %v1185 = vadd.s32 %v1180, %v1182
    %vm1186 = vc.u32 %v1180, %v1182
    %v1187 = vadd.s32 %v1183, 1
    %v1188 = vsel %vm1186, %v1187, %v1183
    %v1189 = vadd.s32 %v1184, %v1188
    %v1190 = vadd.s32 %v1189, 536870912
    %v1191 = vshrl.u32 %v1190, 30
    %v1192 = vshll.u32 %v1191, 30
    %v1193 = vsub.s32 %v1189, %v1192
    %vm1194 = vcmp.lt.s32.totalorder %v1193, 0
    %v1195 = vsub.s32 0, %v1193
    %v1196 = vsel %vm1194, %v1195, %v1193
    %v1197 = vclz %v1196
    %v1198 = vsub.s32 %v1197, 2
    %vm1199 = vcmp.gt.s32.totalorder 0, %v1198
    %v1200 = vsel %vm1199, 0, %v1198
    %v1201 = vsub.s32 32, %v1200
    %v1202 = vshll.u32 %v1193, %v1200
    %v1203 = vshrl.u32 %v1185, %v1201
    %v1204 = vor.u32 %v1202, %v1203
    %v1205 = vsub.s32 4294967266, %v1200
    %v1206 = vadd.s32 %v1205, 127
    %v1207 = vshll.u32 %v1206, 23
    %v1208 = vor.u32 4788187, %v1207
    %v1209 = vand.u32 2147483647, %v1208
    %v1211 = vcvt.s32.f32 %v1204
    %v1212 = vmul.f32 %v1211, %v1209
    %v1213 = vxor.u32 %v1212, 2147483648
    %v1214 = vsel %vm1131, %v1213, %v1212
    %v1215 = vsub.s32 4, %v1191
    %v1216 = vsel %vm1131, %v1215, %v1191
    %v1217 = vsel %vm1130, %v977, %v1214
    %v1218 = vsel %vm1130, 0, %v1216
    %v1219 = vcosq.f32.pop %v1217
    %v1220 = vsinq.f32.pop %v1217
    %vm1221 = vweird.f32 %v977
    %v1222 = vadd.s32 %v1218, 3
    %v1223 = vand.u32 %v1222, 3
    %vm1224 = vcmp.lt.s32.totalorder %v1223, 2
    %vm1225 = vcmp.eq.s32.totalorder %v1223, 0
    %v1226 = vxor.u32 %v1220, 2147483648
    %v1227 = vsel %vm1225, %v1219, %v1226
    %vm1228 = vcmp.eq.s32.totalorder %v1223, 2
    %v1229 = vxor.u32 %v1219, 2147483648
    %v1230 = vsel %vm1228, %v1229, %v1220
    %v1231 = vsel %vm1224, %v1227, %v1230
    %v1232 = vsel %vm1221, nan, %v1231
    %v1233 = vadd.f32 %v976, %v1023
    %v1234 = vadd.f32 %v977, %v1024
    %v1235 = vadd.f32 %v1023, %v297
    %v1236 = vadd.f32 %v1024, %v301
    %v1237 = vpack.c.bf16 %v1128, %v1128
    %v1238 = vpack.c.bf16 %v1232, %v1232
    %1239 = vmatprep.subr.bf16.mxu0 %v419
    %1240 = vmatpush1.bf16.msra.mxu0 %v418
    %1241 = vmatprep.subr.bf16.mxu0 %v417
    %1242 = vmatpush1.bf16.msra.mxu0 %v416
    %1243 = vmatprep.subr.bf16.mxu0 %v415
    %1244 = vmatpush1.bf16.msra.mxu0 %v414
    %1245 = vmatprep.subr.bf16.mxu0 %v413
    %1246 = vmatpush1.bf16.msra.mxu0 %v412
    %1247 = vmatprep.subr.bf16.mxu0 %v411
    %1248 = vmatpush1.bf16.msra.mxu0 %v410
    %1249 = vmatprep.subr.bf16.mxu0 %v409
    %1250 = vmatpush1.bf16.msra.mxu0 %v408
    %1251 = vmatprep.subr.bf16.mxu0 %v407
    %1252 = vmatpush1.bf16.msra.mxu0 %v406
    %1253 = vmatprep.subr.bf16.mxu0 %v405
    %1254 = vmatpush1.bf16.msra.mxu0 %v404
    %1255 = vmatprep.subr.bf16.mxu0 %v435
    %1256 = vmatpush2.bf16.msra.mxu0 %v434
    %1257 = vmatprep.subr.bf16.mxu0 %v433
    %1258 = vmatpush2.bf16.msra.mxu0 %v432
    %1259 = vmatprep.subr.bf16.mxu0 %v431
    %1260 = vmatpush2.bf16.msra.mxu0 %v430
    %1261 = vmatprep.subr.bf16.mxu0 %v429
    %1262 = vmatpush2.bf16.msra.mxu0 %v428
    %1263 = vmatprep.subr.bf16.mxu0 %v427
    %1264 = vmatpush2.bf16.msra.mxu0 %v426
    %1265 = vmatprep.subr.bf16.mxu0 %v425
    %1266 = vmatpush2.bf16.msra.mxu0 %v424
    %1267 = vmatprep.subr.bf16.mxu0 %v423
    %1268 = vmatpush2.bf16.msra.mxu0 %v422
    %1269 = vmatprep.subr.bf16.mxu0 %v421
    %1270 = vmatpush2.bf16.msra.mxu0 %v420
    %1271 = vmatprep.mubr.bf16.mxu0 %v1238
    %1272 = vmatmul.mubr.bf16.gmra.mxu0 %v1237
    %v1273 = vpop.f32.mrf.mxu0
    %v1274 = vadd.f32 0.0, %v1273
    %v1275 = vpop.f32.mrf.mxu0
    %v1276 = vadd.f32 0.0, %v1275
    %v1277 = vpop.f32.mrf.mxu0
    %v1278 = vpop.f32.mrf.mxu0
    %1279 = vdwg.mxu0
    %v1280 = vadd.f32 %v1235, %v1274
    %v1281 = vadd.f32 %v1236, %v1276
    %v1282 = vadd.f32 %v1233, %v1280
    %v1283 = vadd.f32 %v1234, %v1281
    %v1284 = vld [vmem:[#allocation4] sm:$0xff]
    %v1285 = vld [vmem:[#allocation4 + $0x8] sm:$0xff]
    %v1286 = vld [vmem:[#allocation4 + $0x10] sm:$0xff]
    %v1287 = vld [vmem:[#allocation4 + $0x18] sm:$0xff]
    %v1288 = vld [vmem:[#allocation4 + $0x20] sm:$0xff]
    %v1289 = vld [vmem:[#allocation4 + $0x28] sm:$0xff]
    %v1290 = vld [vmem:[#allocation4 + $0x30] sm:$0xff]
    %v1291 = vld [vmem:[#allocation4 + $0x38] sm:$0xff]
    %v1292 = vld [vmem:[#allocation4 + $0x40] sm:$0xff]
    %v1293 = vld [vmem:[#allocation4 + $0x48] sm:$0xff]
    %v1294 = vld [vmem:[#allocation4 + $0x50] sm:$0xff]
    %v1295 = vld [vmem:[#allocation4 + $0x58] sm:$0xff]
    %v1296 = vld [vmem:[#allocation4 + $0x60] sm:$0xff]
    %v1297 = vld [vmem:[#allocation4 + $0x68] sm:$0xff]
    %v1298 = vld [vmem:[#allocation4 + $0x70] sm:$0xff]
    %v1299 = vld [vmem:[#allocation4 + $0x78] sm:$0xff]
    %v1300 = vld [vmem:[#allocation4 + $0x80] sm:$0xff]
    %v1301 = vld [vmem:[#allocation4 + $0x88] sm:$0xff]
    %v1302 = vld [vmem:[#allocation4 + $0x90] sm:$0xff]
    %v1303 = vld [vmem:[#allocation4 + $0x98] sm:$0xff]
    %v1304 = vld [vmem:[#allocation4 + $0xa0] sm:$0xff]
    %v1305 = vld [vmem:[#allocation4 + $0xa8] sm:$0xff]
    %v1306 = vld [vmem:[#allocation4 + $0xb0] sm:$0xff]
    %v1307 = vld [vmem:[#allocation4 + $0xb8] sm:$0xff]
    %v1308 = vld [vmem:[#allocation4 + $0xc0] sm:$0xff]
    %v1309 = vld [vmem:[#allocation4 + $0xc8] sm:$0xff]
    %v1310 = vld [vmem:[#allocation4 + $0xd0] sm:$0xff]
    %v1311 = vld [vmem:[#allocation4 + $0xd8] sm:$0xff]
    %v1312 = vld [vmem:[#allocation4 + $0xe0] sm:$0xff]
    %v1313 = vld [vmem:[#allocation4 + $0xe8] sm:$0xff]
    %v1314 = vld [vmem:[#allocation4 + $0xf0] sm:$0xff]
    %v1315 = vld [vmem:[#allocation4 + $0xf8] sm:$0xff]
    %v1316 = vld [vmem:[%s4] sm:$0x3]
    %v1317 = vand.u32 2147483647, %v1282
    %vm1318 = vcmp.le.f32.partialorder %v1317, 0.7853982
    %vm1319 = vcmp.lt.s32.totalorder %v1282, 0
    %v1320 = vand.u32 %v1282, 2139095040
    %v1321 = vshrl.u32 %v1320, 23
    %v1322 = vsub.s32 %v1321, 127
    %v1323 = vand.u32 2147483647, %v1282
    %v1324 = vand.u32 %v1323, 8388607
    %v1325 = vor.u32 %v1324, 8388608
    %v1326 = vsub.s32 0, %v1325
    %v1327 = vadd.s32 %v1322, 1
    %vm1328 = vcmp.gt.s32.totalorder %v1327, 0
    %v1329 = vsel %vm1328, %v1327, 0
    %v1330 = vshrl.u32 %v1329, 5
    %v1331 = vand.u32 %v1329, 31
    %v1332 = vsub.s32 32, %v1331
    %v1333 = vshrl.u32 683565275, %v1332
    %v1334 = vshll.u32 683565275, %v1331
    %v1335 = vshrl.u32 2475754826, %v1332
    %v1336 = vor.u32 %v1334, %v1335
    %v1337 = vshll.u32 2475754826, %v1331
    %v1338 = vshrl.u32 2131351028, %v1332
    %v1339 = vor.u32 %v1337, %v1338
    %v1340 = vshll.u32 2131351028, %v1331
    %v1341 = vshrl.u32 2102212464, %v1332
    %v1342 = vor.u32 %v1340, %v1341
    %v1343 = vshll.u32 2102212464, %v1331
    %v1344 = vshrl.u32 920167782, %v1332
    %v1345 = vor.u32 %v1343, %v1344
    %v1346 = vshll.u32 920167782, %v1331
    %v1347 = vshrl.u32 1326507024, %v1332
    %v1348 = vor.u32 %v1346, %v1347
    %vm1349 = vcmp.lt.s32.totalorder %v1330, 1
    %vm1350 = vcmp.lt.s32.totalorder %v1330, 2
    %vm1351 = vcmp.lt.s32.totalorder %v1330, 3
    %vm1352 = vcmp.lt.s32.totalorder %v1330, 4
    %v1353 = vsel %vm1349, %v1333, %v1336
    %v1354 = vsel %vm1352, %v1342, 2102212464
    %v1355 = vsel %vm1351, %v1339, %v1354
    %v1356 = vsel %vm1350, %v1353, %v1355
    %v1357 = vsel %vm1349, %v1336, %v1339
    %v1358 = vsel %vm1352, %v1345, 920167782
    %v1359 = vsel %vm1351, %v1342, %v1358
    %v1360 = vsel %vm1350, %v1357, %v1359
    %v1361 = vsel %vm1349, %v1339, %v1342
    %v1362 = vsel %vm1352, %v1348, 1326507024
    %v1363 = vsel %vm1351, %v1345, %v1362
    %v1364 = vsel %vm1350, %v1361, %v1363
    %v1365 = vshll.u32 %v1325, 8
    %v1366 = vmul.u32.u64.compose %v1365, %v1364
    %v1367 = vextract.low.u32 %v1366
    %v1368 = vextract.high.u32 %v1366
    %v1369 = vmul.u32.u64.compose %v1365, %v1360
    %v1370 = vextract.low.u32 %v1369
    %v1371 = vextract.high.u32 %v1369
    %v1372 = vmul.u32 %v1365, %v1356
    %v1373 = vadd.s32 %v1368, %v1370
    %vm1374 = vc.u32 %v1368, %v1370
    %v1375 = vadd.s32 %v1371, 1
    %v1376 = vsel %vm1374, %v1375, %v1371
    %v1377 = vadd.s32 %v1372, %v1376
    %v1378 = vadd.s32 %v1377, 536870912
    %v1379 = vshrl.u32 %v1378, 30
    %v1380 = vshll.u32 %v1379, 30
    %v1381 = vsub.s32 %v1377, %v1380
    %vm1382 = vcmp.lt.s32.totalorder %v1381, 0
    %v1383 = vsub.s32 0, %v1381
    %v1384 = vsel %vm1382, %v1383, %v1381
    %v1385 = vclz %v1384
    %v1386 = vsub.s32 %v1385, 2
    %vm1387 = vcmp.gt.s32.totalorder 0, %v1386
    %v1388 = vsel %vm1387, 0, %v1386
    %v1389 = vsub.s32 32, %v1388
    %v1390 = vshll.u32 %v1381, %v1388
    %v1391 = vshrl.u32 %v1373, %v1389
    %v1392 = vor.u32 %v1390, %v1391
    %v1393 = vsub.s32 4294967266, %v1388
    %v1394 = vadd.s32 %v1393, 127
    %v1395 = vshll.u32 %v1394, 23
    %v1396 = vor.u32 4788187, %v1395
    %v1397 = vand.u32 2147483647, %v1396
    %v1399 = vcvt.s32.f32 %v1392
    %v1400 = vmul.f32 %v1399, %v1397
    %v1401 = vxor.u32 %v1400, 2147483648
    %v1402 = vsel %vm1319, %v1401, %v1400
    %v1403 = vsub.s32 4, %v1379
    %v1404 = vsel %vm1319, %v1403, %v1379
    %v1405 = vsel %vm1318, %v1282, %v1402
    %v1406 = vsel %vm1318, 0, %v1404
    %v1407 = vcosq.f32.pop %v1405
    %v1408 = vsinq.f32.pop %v1405
    %vm1409 = vweird.f32 %v1282
    %v1410 = vadd.s32 %v1406, 3
    %v1411 = vand.u32 %v1410, 3
    %vm1412 = vcmp.lt.s32.totalorder %v1411, 2
    %vm1413 = vcmp.eq.s32.totalorder %v1411, 0
    %v1414 = vxor.u32 %v1408, 2147483648
    %v1415 = vsel %vm1413, %v1407, %v1414
    %vm1416 = vcmp.eq.s32.totalorder %v1411, 2
    %v1417 = vxor.u32 %v1407, 2147483648
    %v1418 = vsel %vm1416, %v1417, %v1408
    %v1419 = vsel %vm1412, %v1415, %v1418
    %v1420 = vsel %vm1409, nan, %v1419
    %v1421 = vand.u32 2147483647, %v1283
    %vm1422 = vcmp.le.f32.partialorder %v1421, 0.7853982
    %vm1423 = vcmp.lt.s32.totalorder %v1283, 0
    %v1424 = vand.u32 %v1283, 2139095040
    %v1425 = vshrl.u32 %v1424, 23
    %v1426 = vsub.s32 %v1425, 127
    %v1427 = vand.u32 2147483647, %v1283
    %v1428 = vand.u32 %v1427, 8388607
    %v1429 = vor.u32 %v1428, 8388608
    %v1430 = vsub.s32 0, %v1429
    %v1431 = vadd.s32 %v1426, 1
    %vm1432 = vcmp.gt.s32.totalorder %v1431, 0
    %v1433 = vsel %vm1432, %v1431, 0
    %v1434 = vshrl.u32 %v1433, 5
    %v1435 = vand.u32 %v1433, 31
    %v1436 = vsub.s32 32, %v1435
    %v1437 = vshrl.u32 683565275, %v1436
    %v1438 = vshll.u32 683565275, %v1435
    %v1439 = vshrl.u32 2475754826, %v1436
    %v1440 = vor.u32 %v1438, %v1439
    %v1441 = vshll.u32 2475754826, %v1435
    %v1442 = vshrl.u32 2131351028, %v1436
    %v1443 = vor.u32 %v1441, %v1442
    %v1444 = vshll.u32 2131351028, %v1435
    %v1445 = vshrl.u32 2102212464, %v1436
    %v1446 = vor.u32 %v1444, %v1445
    %v1447 = vshll.u32 2102212464, %v1435
    %v1448 = vshrl.u32 920167782, %v1436
    %v1449 = vor.u32 %v1447, %v1448
    %v1450 = vshll.u32 920167782, %v1435
    %v1451 = vshrl.u32 1326507024, %v1436
    %v1452 = vor.u32 %v1450, %v1451
    %vm1453 = vcmp.lt.s32.totalorder %v1434, 1
    %vm1454 = vcmp.lt.s32.totalorder %v1434, 2
    %vm1455 = vcmp.lt.s32.totalorder %v1434, 3
    %vm1456 = vcmp.lt.s32.totalorder %v1434, 4
    %v1457 = vsel %vm1453, %v1437, %v1440
    %v1458 = vsel %vm1456, %v1446, 2102212464
    %v1459 = vsel %vm1455, %v1443, %v1458
    %v1460 = vsel %vm1454, %v1457, %v1459
    %v1461 = vsel %vm1453, %v1440, %v1443
    %v1462 = vsel %vm1456, %v1449, 920167782
    %v1463 = vsel %vm1455, %v1446, %v1462
    %v1464 = vsel %vm1454, %v1461, %v1463
    %v1465 = vsel %vm1453, %v1443, %v1446
    %v1466 = vsel %vm1456, %v1452, 1326507024
    %v1467 = vsel %vm1455, %v1449, %v1466
    %v1468 = vsel %vm1454, %v1465, %v1467
    %v1469 = vshll.u32 %v1429, 8
    %v1470 = vmul.u32.u64.compose %v1469, %v1468
    %v1471 = vextract.low.u32 %v1470
    %v1472 = vextract.high.u32 %v1470
    %v1473 = vmul.u32.u64.compose %v1469, %v1464
    %v1474 = vextract.low.u32 %v1473
    %v1475 = vextract.high.u32 %v1473
    %v1476 = vmul.u32 %v1469, %v1460
    %v1477 = vadd.s32 %v1472, %v1474
    %vm1478 = vc.u32 %v1472, %v1474
    %v1479 = vadd.s32 %v1475, 1
    %v1480 = vsel %vm1478, %v1479, %v1475
    %v1481 = vadd.s32 %v1476, %v1480
    %v1482 = vadd.s32 %v1481, 536870912
    %v1483 = vshrl.u32 %v1482, 30
    %v1484 = vshll.u32 %v1483, 30
    %v1485 = vsub.s32 %v1481, %v1484
    %vm1486 = vcmp.lt.s32.totalorder %v1485, 0
    %v1487 = vsub.s32 0, %v1485
    %v1488 = vsel %vm1486, %v1487, %v1485
    %v1489 = vclz %v1488
    %v1490 = vsub.s32 %v1489, 2
    %vm1491 = vcmp.gt.s32.totalorder 0, %v1490
    %v1492 = vsel %vm1491, 0, %v1490
    %v1493 = vsub.s32 32, %v1492
    %v1494 = vshll.u32 %v1485, %v1492
    %v1495 = vshrl.u32 %v1477, %v1493
    %v1496 = vor.u32 %v1494, %v1495
    %v1497 = vsub.s32 4294967266, %v1492
    %v1498 = vadd.s32 %v1497, 127
    %v1499 = vshll.u32 %v1498, 23
    %v1500 = vor.u32 4788187, %v1499
    %v1501 = vand.u32 2147483647, %v1500
    %v1503 = vcvt.s32.f32 %v1496
    %v1504 = vmul.f32 %v1503, %v1501
    %v1505 = vxor.u32 %v1504, 2147483648
    %v1506 = vsel %vm1423, %v1505, %v1504
    %v1507 = vsub.s32 4, %v1483
    %v1508 = vsel %vm1423, %v1507, %v1483
    %v1509 = vsel %vm1422, %v1283, %v1506
    %v1510 = vsel %vm1422, 0, %v1508
    %v1511 = vcosq.f32.pop %v1509
    %v1512 = vsinq.f32.pop %v1509
    %vm1513 = vweird.f32 %v1283
    %v1514 = vadd.s32 %v1510, 3
    %v1515 = vand.u32 %v1514, 3
    %vm1516 = vcmp.lt.s32.totalorder %v1515, 2
    %vm1517 = vcmp.eq.s32.totalorder %v1515, 0
    %v1518 = vxor.u32 %v1512, 2147483648
    %v1519 = vsel %vm1517, %v1511, %v1518
    %vm1520 = vcmp.eq.s32.totalorder %v1515, 2
    %v1521 = vxor.u32 %v1511, 2147483648
    %v1522 = vsel %vm1520, %v1521, %v1512
    %v1523 = vsel %vm1516, %v1519, %v1522
    %v1524 = vsel %vm1513, nan, %v1523
    %v1525 = vadd.f32 %v1282, 0.0
    %v1526 = vadd.f32 %v1283, 0.0
    %v1528 = vlaneseq
    %v1529 = vshrl.u32 %v1528, 7
    %v1530 = vsub.s32 0, %v1529
    %v1531 = vrot.slane %v1316, %v1530
    %v1532 = vlaneseq
    %v1533 = vshrl.u32 %v1532, 7
    %v1534 = vsub.s32 1, %v1533
    %v1535 = vrot.slane %v1316, %v1534
    %v1538 = vadd.f32 %v1531, 0.0
    %v1539 = vadd.f32 %v1535, 0.0
    %v1540 = vpack.c.bf16 %v1420, %v1420
    %v1541 = vpack.c.bf16 %v1524, %v1524
    %v1574 = vunpack.c.l.b16 %v1284
    %v1575 = vunpack.c.h.b16 %v1284
    %v1576 = vunpack.c.l.b16 %v1285
    %v1577 = vunpack.c.h.b16 %v1285
    %v1578 = vunpack.c.l.b16 %v1286
    %v1579 = vunpack.c.h.b16 %v1286
    %v1580 = vunpack.c.l.b16 %v1287
    %v1581 = vunpack.c.h.b16 %v1287
    %v1582 = vunpack.c.l.b16 %v1288
    %v1583 = vunpack.c.h.b16 %v1288
    %v1584 = vunpack.c.l.b16 %v1289
    %v1585 = vunpack.c.h.b16 %v1289
    %v1586 = vunpack.c.l.b16 %v1290
    %v1587 = vunpack.c.h.b16 %v1290
    %v1588 = vunpack.c.l.b16 %v1291
    %v1589 = vunpack.c.h.b16 %v1291
    %v1590 = vunpack.c.l.b16 %v1292
    %v1591 = vunpack.c.h.b16 %v1292
    %v1592 = vunpack.c.l.b16 %v1293
    %v1593 = vunpack.c.h.b16 %v1293
    %v1594 = vunpack.c.l.b16 %v1294
    %v1595 = vunpack.c.h.b16 %v1294
    %v1596 = vunpack.c.l.b16 %v1295
    %v1597 = vunpack.c.h.b16 %v1295
    %v1598 = vunpack.c.l.b16 %v1296
    %v1599 = vunpack.c.h.b16 %v1296
    %v1600 = vunpack.c.l.b16 %v1297
    %v1601 = vunpack.c.h.b16 %v1297
    %v1602 = vunpack.c.l.b16 %v1298
    %v1603 = vunpack.c.h.b16 %v1298
    %v1604 = vunpack.c.l.b16 %v1299
    %v1605 = vunpack.c.h.b16 %v1299
    %v1606 = vunpack.c.l.b16 %v1300
    %v1607 = vunpack.c.h.b16 %v1300
    %v1608 = vunpack.c.l.b16 %v1301
    %v1609 = vunpack.c.h.b16 %v1301
    %v1610 = vunpack.c.l.b16 %v1302
    %v1611 = vunpack.c.h.b16 %v1302
    %v1612 = vunpack.c.l.b16 %v1303
    %v1613 = vunpack.c.h.b16 %v1303
    %v1614 = vunpack.c.l.b16 %v1304
    %v1615 = vunpack.c.h.b16 %v1304
    %v1616 = vunpack.c.l.b16 %v1305
    %v1617 = vunpack.c.h.b16 %v1305
    %v1618 = vunpack.c.l.b16 %v1306
    %v1619 = vunpack.c.h.b16 %v1306
    %v1620 = vunpack.c.l.b16 %v1307
    %v1621 = vunpack.c.h.b16 %v1307
    %v1622 = vunpack.c.l.b16 %v1308
    %v1623 = vunpack.c.h.b16 %v1308
    %v1624 = vunpack.c.l.b16 %v1309
    %v1625 = vunpack.c.h.b16 %v1309
    %v1626 = vunpack.c.l.b16 %v1310
    %v1627 = vunpack.c.h.b16 %v1310
    %v1628 = vunpack.c.l.b16 %v1311
    %v1629 = vunpack.c.h.b16 %v1311
    %v1630 = vunpack.c.l.b16 %v1312
    %v1631 = vunpack.c.h.b16 %v1312
    %v1632 = vunpack.c.l.b16 %v1313
    %v1633 = vunpack.c.h.b16 %v1313
    %v1634 = vunpack.c.l.b16 %v1314
    %v1635 = vunpack.c.h.b16 %v1314
    %v1636 = vunpack.c.l.b16 %v1315
    %v1637 = vunpack.c.h.b16 %v1315
    %v1638 = vpack.c.b16 %v1576, %v1574
    %v1639 = vpack.c.b16 %v1577, %v1575
    %v1640 = vpack.c.b16 %v1580, %v1578
    %v1641 = vpack.c.b16 %v1581, %v1579
    %v1642 = vpack.c.b16 %v1584, %v1582
    %v1643 = vpack.c.b16 %v1585, %v1583
    %v1644 = vpack.c.b16 %v1588, %v1586
    %v1645 = vpack.c.b16 %v1589, %v1587
    %v1646 = vpack.c.b16 %v1592, %v1590
    %v1647 = vpack.c.b16 %v1593, %v1591
    %v1648 = vpack.c.b16 %v1596, %v1594
    %v1649 = vpack.c.b16 %v1597, %v1595
    %v1650 = vpack.c.b16 %v1600, %v1598
    %v1651 = vpack.c.b16 %v1601, %v1599
    %v1652 = vpack.c.b16 %v1604, %v1602
    %v1653 = vpack.c.b16 %v1605, %v1603
    %v1654 = vpack.c.b16 %v1608, %v1606
    %v1655 = vpack.c.b16 %v1609, %v1607
    %v1656 = vpack.c.b16 %v1612, %v1610
    %v1657 = vpack.c.b16 %v1613, %v1611
    %v1658 = vpack.c.b16 %v1616, %v1614
    %v1659 = vpack.c.b16 %v1617, %v1615
    %v1660 = vpack.c.b16 %v1620, %v1618
    %v1661 = vpack.c.b16 %v1621, %v1619
    %v1662 = vpack.c.b16 %v1624, %v1622
    %v1663 = vpack.c.b16 %v1625, %v1623
    %v1664 = vpack.c.b16 %v1628, %v1626
    %v1665 = vpack.c.b16 %v1629, %v1627
    %v1666 = vpack.c.b16 %v1632, %v1630
    %v1667 = vpack.c.b16 %v1633, %v1631
    %v1668 = vpack.c.b16 %v1636, %v1634
    %v1669 = vpack.c.b16 %v1637, %v1635
    %1702 = vmatprep.subr.bf16.mxu0 %v1653
    %1703 = vmatpush1.bf16.msra.mxu0 %v1652
    %1704 = vmatprep.subr.bf16.mxu0 %v1651
    %1705 = vmatpush1.bf16.msra.mxu0 %v1650
    %1706 = vmatprep.subr.bf16.mxu0 %v1649
    %1707 = vmatpush1.bf16.msra.mxu0 %v1648
    %1708 = vmatprep.subr.bf16.mxu0 %v1647
    %1709 = vmatpush1.bf16.msra.mxu0 %v1646
    %1710 = vmatprep.subr.bf16.mxu0 %v1645
    %1711 = vmatpush1.bf16.msra.mxu0 %v1644
    %1712 = vmatprep.subr.bf16.mxu0 %v1643
    %1713 = vmatpush1.bf16.msra.mxu0 %v1642
    %1714 = vmatprep.subr.bf16.mxu0 %v1641
    %1715 = vmatpush1.bf16.msra.mxu0 %v1640
    %1716 = vmatprep.subr.bf16.mxu0 %v1639
    %1717 = vmatpush1.bf16.msra.mxu0 %v1638
    %1718 = vmatprep.subr.bf16.mxu0 %v1669
    %1719 = vmatpush2.bf16.msra.mxu0 %v1668
    %1720 = vmatprep.subr.bf16.mxu0 %v1667
    %1721 = vmatpush2.bf16.msra.mxu0 %v1666
    %1722 = vmatprep.subr.bf16.mxu0 %v1665
    %1723 = vmatpush2.bf16.msra.mxu0 %v1664
    %1724 = vmatprep.subr.bf16.mxu0 %v1663
    %1725 = vmatpush2.bf16.msra.mxu0 %v1662
    %1726 = vmatprep.subr.bf16.mxu0 %v1661
    %1727 = vmatpush2.bf16.msra.mxu0 %v1660
    %1728 = vmatprep.subr.bf16.mxu0 %v1659
    %1729 = vmatpush2.bf16.msra.mxu0 %v1658
    %1730 = vmatprep.subr.bf16.mxu0 %v1657
    %1731 = vmatpush2.bf16.msra.mxu0 %v1656
    %1732 = vmatprep.subr.bf16.mxu0 %v1655
    %1733 = vmatpush2.bf16.msra.mxu0 %v1654
    %1734 = vmatprep.mubr.bf16.mxu0 %v1541
    %1735 = vmatmul.mubr.bf16.gmra.mxu0 %v1540
    %v1736 = vpop.f32.mrf.mxu0
    %v1737 = vadd.f32 0.0, %v1736
    %v1738 = vpop.f32.mrf.mxu0
    %v1739 = vadd.f32 0.0, %v1738
    %v1740 = vpop.f32.mrf.mxu0
    %v1741 = vpop.f32.mrf.mxu0
    %1742 = vdwg.mxu0
    %v1743 = vadd.f32 %v1538, %v1737
    %v1744 = vadd.f32 %v1539, %v1739
    %v1745 = vand.u32 2147483647, %v1525
    %vm1746 = vcmp.le.f32.partialorder %v1745, 0.7853982
    %vm1747 = vcmp.lt.s32.totalorder %v1525, 0
    %v1748 = vand.u32 %v1525, 2139095040
    %v1749 = vshrl.u32 %v1748, 23
    %v1750 = vsub.s32 %v1749, 127
    %v1751 = vand.u32 2147483647, %v1525
    %v1752 = vand.u32 %v1751, 8388607
    %v1753 = vor.u32 %v1752, 8388608
    %v1754 = vsub.s32 0, %v1753
    %v1755 = vadd.s32 %v1750, 1
    %vm1756 = vcmp.gt.s32.totalorder %v1755, 0
    %v1757 = vsel %vm1756, %v1755, 0
    %v1758 = vshrl.u32 %v1757, 5
    %v1759 = vand.u32 %v1757, 31
    %v1760 = vsub.s32 32, %v1759
    %v1761 = vshrl.u32 683565275, %v1760
    %v1762 = vshll.u32 683565275, %v1759
    %v1763 = vshrl.u32 2475754826, %v1760
    %v1764 = vor.u32 %v1762, %v1763
    %v1765 = vshll.u32 2475754826, %v1759
    %v1766 = vshrl.u32 2131351028, %v1760
    %v1767 = vor.u32 %v1765, %v1766
    %v1768 = vshll.u32 2131351028, %v1759
    %v1769 = vshrl.u32 2102212464, %v1760
    %v1770 = vor.u32 %v1768, %v1769
    %v1771 = vshll.u32 2102212464, %v1759
    %v1772 = vshrl.u32 920167782, %v1760
    %v1773 = vor.u32 %v1771, %v1772
    %v1774 = vshll.u32 920167782, %v1759
    %v1775 = vshrl.u32 1326507024, %v1760
    %v1776 = vor.u32 %v1774, %v1775
    %vm1777 = vcmp.lt.s32.totalorder %v1758, 1
    %vm1778 = vcmp.lt.s32.totalorder %v1758, 2
    %vm1779 = vcmp.lt.s32.totalorder %v1758, 3
    %vm1780 = vcmp.lt.s32.totalorder %v1758, 4
    %v1781 = vsel %vm1777, %v1761, %v1764
    %v1782 = vsel %vm1780, %v1770, 2102212464
    %v1783 = vsel %vm1779, %v1767, %v1782
    %v1784 = vsel %vm1778, %v1781, %v1783
    %v1785 = vsel %vm1777, %v1764, %v1767
    %v1786 = vsel %vm1780, %v1773, 920167782
    %v1787 = vsel %vm1779, %v1770, %v1786
    %v1788 = vsel %vm1778, %v1785, %v1787
    %v1789 = vsel %vm1777, %v1767, %v1770
    %v1790 = vsel %vm1780, %v1776, 1326507024
    %v1791 = vsel %vm1779, %v1773, %v1790
    %v1792 = vsel %vm1778, %v1789, %v1791
    %v1793 = vshll.u32 %v1753, 8
    %v1794 = vmul.u32.u64.compose %v1793, %v1792
    %v1795 = vextract.low.u32 %v1794
    %v1796 = vextract.high.u32 %v1794
    %v1797 = vmul.u32.u64.compose %v1793, %v1788
    %v1798 = vextract.low.u32 %v1797
    %v1799 = vextract.high.u32 %v1797
    %v1800 = vmul.u32 %v1793, %v1784
    %v1801 = vadd.s32 %v1796, %v1798
    %vm1802 = vc.u32 %v1796, %v1798
    %v1803 = vadd.s32 %v1799, 1
    %v1804 = vsel %vm1802, %v1803, %v1799
    %v1805 = vadd.s32 %v1800, %v1804
    %v1806 = vadd.s32 %v1805, 536870912
    %v1807 = vshrl.u32 %v1806, 30
    %v1808 = vshll.u32 %v1807, 30
    %v1809 = vsub.s32 %v1805, %v1808
    %vm1810 = vcmp.lt.s32.totalorder %v1809, 0
    %v1811 = vsub.s32 0, %v1809
    %v1812 = vsel %vm1810, %v1811, %v1809
    %v1813 = vclz %v1812
    %v1814 = vsub.s32 %v1813, 2
    %vm1815 = vcmp.gt.s32.totalorder 0, %v1814
    %v1816 = vsel %vm1815, 0, %v1814
    %v1817 = vsub.s32 32, %v1816
    %v1818 = vshll.u32 %v1809, %v1816
    %v1819 = vshrl.u32 %v1801, %v1817
    %v1820 = vor.u32 %v1818, %v1819
    %v1821 = vsub.s32 4294967266, %v1816
    %v1822 = vadd.s32 %v1821, 127
    %v1823 = vshll.u32 %v1822, 23
    %v1824 = vor.u32 4788187, %v1823
    %v1825 = vand.u32 2147483647, %v1824
    %v1827 = vcvt.s32.f32 %v1820
    %v1828 = vmul.f32 %v1827, %v1825
    %v1829 = vxor.u32 %v1828, 2147483648
    %v1830 = vsel %vm1747, %v1829, %v1828
    %v1831 = vsub.s32 4, %v1807
    %v1832 = vsel %vm1747, %v1831, %v1807
    %v1833 = vsel %vm1746, %v1525, %v1830
    %v1834 = vsel %vm1746, 0, %v1832
    %v1835 = vcosq.f32.pop %v1833
    %v1836 = vsinq.f32.pop %v1833
    %vm1837 = vweird.f32 %v1525
    %v1838 = vadd.s32 %v1834, 3
    %v1839 = vand.u32 %v1838, 3
    %vm1840 = vcmp.lt.s32.totalorder %v1839, 2
    %vm1841 = vcmp.eq.s32.totalorder %v1839, 0
    %v1842 = vxor.u32 %v1836, 2147483648
    %v1843 = vsel %vm1841, %v1835, %v1842
    %vm1844 = vcmp.eq.s32.totalorder %v1839, 2
    %v1845 = vxor.u32 %v1835, 2147483648
    %v1846 = vsel %vm1844, %v1845, %v1836
    %v1847 = vsel %vm1840, %v1843, %v1846
    %v1848 = vsel %vm1837, nan, %v1847
    %v1849 = vand.u32 2147483647, %v1526
    %vm1850 = vcmp.le.f32.partialorder %v1849, 0.7853982
    %vm1851 = vcmp.lt.s32.totalorder %v1526, 0
    %v1852 = vand.u32 %v1526, 2139095040
    %v1853 = vshrl.u32 %v1852, 23
    %v1854 = vsub.s32 %v1853, 127
    %v1855 = vand.u32 2147483647, %v1526
    %v1856 = vand.u32 %v1855, 8388607
    %v1857 = vor.u32 %v1856, 8388608
    %v1858 = vsub.s32 0, %v1857
    %v1859 = vadd.s32 %v1854, 1
    %vm1860 = vcmp.gt.s32.totalorder %v1859, 0
    %v1861 = vsel %vm1860, %v1859, 0
    %v1862 = vshrl.u32 %v1861, 5
    %v1863 = vand.u32 %v1861, 31
    %v1864 = vsub.s32 32, %v1863
    %v1865 = vshrl.u32 683565275, %v1864
    %v1866 = vshll.u32 683565275, %v1863
    %v1867 = vshrl.u32 2475754826, %v1864
    %v1868 = vor.u32 %v1866, %v1867
    %v1869 = vshll.u32 2475754826, %v1863
    %v1870 = vshrl.u32 2131351028, %v1864
    %v1871 = vor.u32 %v1869, %v1870
    %v1872 = vshll.u32 2131351028, %v1863
    %v1873 = vshrl.u32 2102212464, %v1864
    %v1874 = vor.u32 %v1872, %v1873
    %v1875 = vshll.u32 2102212464, %v1863
    %v1876 = vshrl.u32 920167782, %v1864
    %v1877 = vor.u32 %v1875, %v1876
    %v1878 = vshll.u32 920167782, %v1863
    %v1879 = vshrl.u32 1326507024, %v1864
    %v1880 = vor.u32 %v1878, %v1879
    %vm1881 = vcmp.lt.s32.totalorder %v1862, 1
    %vm1882 = vcmp.lt.s32.totalorder %v1862, 2
    %vm1883 = vcmp.lt.s32.totalorder %v1862, 3
    %vm1884 = vcmp.lt.s32.totalorder %v1862, 4
    %v1885 = vsel %vm1881, %v1865, %v1868
    %v1886 = vsel %vm1884, %v1874, 2102212464
    %v1887 = vsel %vm1883, %v1871, %v1886
    %v1888 = vsel %vm1882, %v1885, %v1887
    %v1889 = vsel %vm1881, %v1868, %v1871
    %v1890 = vsel %vm1884, %v1877, 920167782
    %v1891 = vsel %vm1883, %v1874, %v1890
    %v1892 = vsel %vm1882, %v1889, %v1891
    %v1893 = vsel %vm1881, %v1871, %v1874
    %v1894 = vsel %vm1884, %v1880, 1326507024
    %v1895 = vsel %vm1883, %v1877, %v1894
    %v1896 = vsel %vm1882, %v1893, %v1895
    %v1897 = vshll.u32 %v1857, 8
    %v1898 = vmul.u32.u64.compose %v1897, %v1896
    %v1899 = vextract.low.u32 %v1898
    %v1900 = vextract.high.u32 %v1898
    %v1901 = vmul.u32.u64.compose %v1897, %v1892
    %v1902 = vextract.low.u32 %v1901
    %v1903 = vextract.high.u32 %v1901
    %v1904 = vmul.u32 %v1897, %v1888
    %v1905 = vadd.s32 %v1900, %v1902
    %vm1906 = vc.u32 %v1900, %v1902
    %v1907 = vadd.s32 %v1903, 1
    %v1908 = vsel %vm1906, %v1907, %v1903
    %v1909 = vadd.s32 %v1904, %v1908
    %v1910 = vadd.s32 %v1909, 536870912
    %v1911 = vshrl.u32 %v1910, 30
    %v1912 = vshll.u32 %v1911, 30
    %v1913 = vsub.s32 %v1909, %v1912
    %vm1914 = vcmp.lt.s32.totalorder %v1913, 0
    %v1915 = vsub.s32 0, %v1913
    %v1916 = vsel %vm1914, %v1915, %v1913
    %v1917 = vclz %v1916
    %v1918 = vsub.s32 %v1917, 2
    %vm1919 = vcmp.gt.s32.totalorder 0, %v1918
    %v1920 = vsel %vm1919, 0, %v1918
    %v1921 = vsub.s32 32, %v1920
    %v1922 = vshll.u32 %v1913, %v1920
    %v1923 = vshrl.u32 %v1905, %v1921
    %v1924 = vor.u32 %v1922, %v1923
    %v1925 = vsub.s32 4294967266, %v1920
    %v1926 = vadd.s32 %v1925, 127
    %v1927 = vshll.u32 %v1926, 23
    %v1928 = vor.u32 4788187, %v1927
    %v1929 = vand.u32 2147483647, %v1928
    %v1931 = vcvt.s32.f32 %v1924
    %v1932 = vmul.f32 %v1931, %v1929
    %v1933 = vxor.u32 %v1932, 2147483648
    %v1934 = vsel %vm1851, %v1933, %v1932
    %v1935 = vsub.s32 4, %v1911
    %v1936 = vsel %vm1851, %v1935, %v1911
    %v1937 = vsel %vm1850, %v1526, %v1934
    %v1938 = vsel %vm1850, 0, %v1936
    %v1939 = vcosq.f32.pop %v1937
    %v1940 = vsinq.f32.pop %v1937
    %vm1941 = vweird.f32 %v1526
    %v1942 = vadd.s32 %v1938, 3
    %v1943 = vand.u32 %v1942, 3
    %vm1944 = vcmp.lt.s32.totalorder %v1943, 2
    %vm1945 = vcmp.eq.s32.totalorder %v1943, 0
    %v1946 = vxor.u32 %v1940, 2147483648
    %v1947 = vsel %vm1945, %v1939, %v1946
    %vm1948 = vcmp.eq.s32.totalorder %v1943, 2
    %v1949 = vxor.u32 %v1939, 2147483648
    %v1950 = vsel %vm1948, %v1949, %v1940
    %v1951 = vsel %vm1944, %v1947, %v1950
    %v1952 = vsel %vm1941, nan, %v1951
    %v1953 = vadd.f32 %v1525, %v1743
    %v1954 = vadd.f32 %v1526, %v1744
    %v1955 = vadd.f32 %v1743, %v1531
    %v1956 = vadd.f32 %v1744, %v1535
    %v1957 = vpack.c.bf16 %v1848, %v1848
    %v1958 = vpack.c.bf16 %v1952, %v1952
    %1959 = vmatprep.subr.bf16.mxu0 %v1653
    %1960 = vmatpush1.bf16.msra.mxu0 %v1652
    %1961 = vmatprep.subr.bf16.mxu0 %v1651
    %1962 = vmatpush1.bf16.msra.mxu0 %v1650
    %1963 = vmatprep.subr.bf16.mxu0 %v1649
    %1964 = vmatpush1.bf16.msra.mxu0 %v1648
    %1965 = vmatprep.subr.bf16.mxu0 %v1647
    %1966 = vmatpush1.bf16.msra.mxu0 %v1646
    %1967 = vmatprep.subr.bf16.mxu0 %v1645
    %1968 = vmatpush1.bf16.msra.mxu0 %v1644
    %1969 = vmatprep.subr.bf16.mxu0 %v1643
    %1970 = vmatpush1.bf16.msra.mxu0 %v1642
    %1971 = vmatprep.subr.bf16.mxu0 %v1641
    %1972 = vmatpush1.bf16.msra.mxu0 %v1640
    %1973 = vmatprep.subr.bf16.mxu0 %v1639
    %1974 = vmatpush1.bf16.msra.mxu0 %v1638
    %1975 = vmatprep.subr.bf16.mxu0 %v1669
    %1976 = vmatpush2.bf16.msra.mxu0 %v1668
    %1977 = vmatprep.subr.bf16.mxu0 %v1667
    %1978 = vmatpush2.bf16.msra.mxu0 %v1666
    %1979 = vmatprep.subr.bf16.mxu0 %v1665
    %1980 = vmatpush2.bf16.msra.mxu0 %v1664
    %1981 = vmatprep.subr.bf16.mxu0 %v1663
    %1982 = vmatpush2.bf16.msra.mxu0 %v1662
    %1983 = vmatprep.subr.bf16.mxu0 %v1661
    %1984 = vmatpush2.bf16.msra.mxu0 %v1660
    %1985 = vmatprep.subr.bf16.mxu0 %v1659
    %1986 = vmatpush2.bf16.msra.mxu0 %v1658
    %1987 = vmatprep.subr.bf16.mxu0 %v1657
    %1988 = vmatpush2.bf16.msra.mxu0 %v1656
    %1989 = vmatprep.subr.bf16.mxu0 %v1655
    %1990 = vmatpush2.bf16.msra.mxu0 %v1654
    %1991 = vmatprep.mubr.bf16.mxu0 %v1958
    %1992 = vmatmul.mubr.bf16.gmra.mxu0 %v1957
    %v1993 = vpop.f32.mrf.mxu0
    %v1994 = vadd.f32 0.0, %v1993
    %v1995 = vpop.f32.mrf.mxu0
    %v1996 = vadd.f32 0.0, %v1995
    %v1997 = vpop.f32.mrf.mxu0
    %v1998 = vpop.f32.mrf.mxu0
    %1999 = vdwg.mxu0
    %v2000 = vadd.f32 %v1955, %v1994
    %v2001 = vadd.f32 %v1956, %v1996
    %v2002 = vand.u32 2147483647, %v1953
    %vm2003 = vcmp.le.f32.partialorder %v2002, 0.7853982
    %vm2004 = vcmp.lt.s32.totalorder %v1953, 0
    %v2005 = vand.u32 %v1953, 2139095040
    %v2006 = vshrl.u32 %v2005, 23
    %v2007 = vsub.s32 %v2006, 127
    %v2008 = vand.u32 2147483647, %v1953
    %v2009 = vand.u32 %v2008, 8388607
    %v2010 = vor.u32 %v2009, 8388608
    %v2011 = vsub.s32 0, %v2010
    %v2012 = vadd.s32 %v2007, 1
    %vm2013 = vcmp.gt.s32.totalorder %v2012, 0
    %v2014 = vsel %vm2013, %v2012, 0
    %v2015 = vshrl.u32 %v2014, 5
    %v2016 = vand.u32 %v2014, 31
    %v2017 = vsub.s32 32, %v2016
    %v2018 = vshrl.u32 683565275, %v2017
    %v2019 = vshll.u32 683565275, %v2016
    %v2020 = vshrl.u32 2475754826, %v2017
    %v2021 = vor.u32 %v2019, %v2020
    %v2022 = vshll.u32 2475754826, %v2016
    %v2023 = vshrl.u32 2131351028, %v2017
    %v2024 = vor.u32 %v2022, %v2023
    %v2025 = vshll.u32 2131351028, %v2016
    %v2026 = vshrl.u32 2102212464, %v2017
    %v2027 = vor.u32 %v2025, %v2026
    %v2028 = vshll.u32 2102212464, %v2016
    %v2029 = vshrl.u32 920167782, %v2017
    %v2030 = vor.u32 %v2028, %v2029
    %v2031 = vshll.u32 920167782, %v2016
    %v2032 = vshrl.u32 1326507024, %v2017
    %v2033 = vor.u32 %v2031, %v2032
    %vm2034 = vcmp.lt.s32.totalorder %v2015, 1
    %vm2035 = vcmp.lt.s32.totalorder %v2015, 2
    %vm2036 = vcmp.lt.s32.totalorder %v2015, 3
    %vm2037 = vcmp.lt.s32.totalorder %v2015, 4
    %v2038 = vsel %vm2034, %v2018, %v2021
    %v2039 = vsel %vm2037, %v2027, 2102212464
    %v2040 = vsel %vm2036, %v2024, %v2039
    %v2041 = vsel %vm2035, %v2038, %v2040
    %v2042 = vsel %vm2034, %v2021, %v2024
    %v2043 = vsel %vm2037, %v2030, 920167782
    %v2044 = vsel %vm2036, %v2027, %v2043
    %v2045 = vsel %vm2035, %v2042, %v2044
    %v2046 = vsel %vm2034, %v2024, %v2027
    %v2047 = vsel %vm2037, %v2033, 1326507024
    %v2048 = vsel %vm2036, %v2030, %v2047
    %v2049 = vsel %vm2035, %v2046, %v2048
    %v2050 = vshll.u32 %v2010, 8
    %v2051 = vmul.u32.u64.compose %v2050, %v2049
    %v2052 = vextract.low.u32 %v2051
    %v2053 = vextract.high.u32 %v2051
    %v2054 = vmul.u32.u64.compose %v2050, %v2045
    %v2055 = vextract.low.u32 %v2054
    %v2056 = vextract.high.u32 %v2054
    %v2057 = vmul.u32 %v2050, %v2041
    %v2058 = vadd.s32 %v2053, %v2055
    %vm2059 = vc.u32 %v2053, %v2055
    %v2060 = vadd.s32 %v2056, 1
    %v2061 = vsel %vm2059, %v2060, %v2056
    %v2062 = vadd.s32 %v2057, %v2061
    %v2063 = vadd.s32 %v2062, 536870912
    %v2064 = vshrl.u32 %v2063, 30
    %v2065 = vshll.u32 %v2064, 30
    %v2066 = vsub.s32 %v2062, %v2065
    %vm2067 = vcmp.lt.s32.totalorder %v2066, 0
    %v2068 = vsub.s32 0, %v2066
    %v2069 = vsel %vm2067, %v2068, %v2066
    %v2070 = vclz %v2069
    %v2071 = vsub.s32 %v2070, 2
    %vm2072 = vcmp.gt.s32.totalorder 0, %v2071
    %v2073 = vsel %vm2072, 0, %v2071
    %v2074 = vsub.s32 32, %v2073
    %v2075 = vshll.u32 %v2066, %v2073
    %v2076 = vshrl.u32 %v2058, %v2074
    %v2077 = vor.u32 %v2075, %v2076
    %v2078 = vsub.s32 4294967266, %v2073
    %v2079 = vadd.s32 %v2078, 127
    %v2080 = vshll.u32 %v2079, 23
    %v2081 = vor.u32 4788187, %v2080
    %v2082 = vand.u32 2147483647, %v2081
    %v2084 = vcvt.s32.f32 %v2077
    %v2085 = vmul.f32 %v2084, %v2082
    %v2086 = vxor.u32 %v2085, 2147483648
    %v2087 = vsel %vm2004, %v2086, %v2085
    %v2088 = vsub.s32 4, %v2064
    %v2089 = vsel %vm2004, %v2088, %v2064
    %v2090 = vsel %vm2003, %v1953, %v2087
    %v2091 = vsel %vm2003, 0, %v2089
    %v2092 = vcosq.f32.pop %v2090
    %v2093 = vsinq.f32.pop %v2090
    %vm2094 = vweird.f32 %v1953
    %v2095 = vadd.s32 %v2091, 3
    %v2096 = vand.u32 %v2095, 3
    %vm2097 = vcmp.lt.s32.totalorder %v2096, 2
    %vm2098 = vcmp.eq.s32.totalorder %v2096, 0
    %v2099 = vxor.u32 %v2093, 2147483648
    %v2100 = vsel %vm2098, %v2092, %v2099
    %vm2101 = vcmp.eq.s32.totalorder %v2096, 2
    %v2102 = vxor.u32 %v2092, 2147483648
    %v2103 = vsel %vm2101, %v2102, %v2093
    %v2104 = vsel %vm2097, %v2100, %v2103
    %v2105 = vsel %vm2094, nan, %v2104
    %v2106 = vand.u32 2147483647, %v1954
    %vm2107 = vcmp.le.f32.partialorder %v2106, 0.7853982
    %vm2108 = vcmp.lt.s32.totalorder %v1954, 0
    %v2109 = vand.u32 %v1954, 2139095040
    %v2110 = vshrl.u32 %v2109, 23
    %v2111 = vsub.s32 %v2110, 127
    %v2112 = vand.u32 2147483647, %v1954
    %v2113 = vand.u32 %v2112, 8388607
    %v2114 = vor.u32 %v2113, 8388608
    %v2115 = vsub.s32 0, %v2114
    %v2116 = vadd.s32 %v2111, 1
    %vm2117 = vcmp.gt.s32.totalorder %v2116, 0
    %v2118 = vsel %vm2117, %v2116, 0
    %v2119 = vshrl.u32 %v2118, 5
    %v2120 = vand.u32 %v2118, 31
    %v2121 = vsub.s32 32, %v2120
    %v2122 = vshrl.u32 683565275, %v2121
    %v2123 = vshll.u32 683565275, %v2120
    %v2124 = vshrl.u32 2475754826, %v2121
    %v2125 = vor.u32 %v2123, %v2124
    %v2126 = vshll.u32 2475754826, %v2120
    %v2127 = vshrl.u32 2131351028, %v2121
    %v2128 = vor.u32 %v2126, %v2127
    %v2129 = vshll.u32 2131351028, %v2120
    %v2130 = vshrl.u32 2102212464, %v2121
    %v2131 = vor.u32 %v2129, %v2130
    %v2132 = vshll.u32 2102212464, %v2120
    %v2133 = vshrl.u32 920167782, %v2121
    %v2134 = vor.u32 %v2132, %v2133
    %v2135 = vshll.u32 920167782, %v2120
    %v2136 = vshrl.u32 1326507024, %v2121
    %v2137 = vor.u32 %v2135, %v2136
    %vm2138 = vcmp.lt.s32.totalorder %v2119, 1
    %vm2139 = vcmp.lt.s32.totalorder %v2119, 2
    %vm2140 = vcmp.lt.s32.totalorder %v2119, 3
    %vm2141 = vcmp.lt.s32.totalorder %v2119, 4
    %v2142 = vsel %vm2138, %v2122, %v2125
    %v2143 = vsel %vm2141, %v2131, 2102212464
    %v2144 = vsel %vm2140, %v2128, %v2143
    %v2145 = vsel %vm2139, %v2142, %v2144
    %v2146 = vsel %vm2138, %v2125, %v2128
    %v2147 = vsel %vm2141, %v2134, 920167782
    %v2148 = vsel %vm2140, %v2131, %v2147
    %v2149 = vsel %vm2139, %v2146, %v2148
    %v2150 = vsel %vm2138, %v2128, %v2131
    %v2151 = vsel %vm2141, %v2137, 1326507024
    %v2152 = vsel %vm2140, %v2134, %v2151
    %v2153 = vsel %vm2139, %v2150, %v2152
    %v2154 = vshll.u32 %v2114, 8
    %v2155 = vmul.u32.u64.compose %v2154, %v2153
    %v2156 = vextract.low.u32 %v2155
    %v2157 = vextract.high.u32 %v2155
    %v2158 = vmul.u32.u64.compose %v2154, %v2149
    %v2159 = vextract.low.u32 %v2158
    %v2160 = vextract.high.u32 %v2158
    %v2161 = vmul.u32 %v2154, %v2145
    %v2162 = vadd.s32 %v2157, %v2159
    %vm2163 = vc.u32 %v2157, %v2159
    %v2164 = vadd.s32 %v2160, 1
    %v2165 = vsel %vm2163, %v2164, %v2160
    %v2166 = vadd.s32 %v2161, %v2165
    %v2167 = vadd.s32 %v2166, 536870912
    %v2168 = vshrl.u32 %v2167, 30
    %v2169 = vshll.u32 %v2168, 30
    %v2170 = vsub.s32 %v2166, %v2169
    %vm2171 = vcmp.lt.s32.totalorder %v2170, 0
    %v2172 = vsub.s32 0, %v2170
    %v2173 = vsel %vm2171, %v2172, %v2170
    %v2174 = vclz %v2173
    %v2175 = vsub.s32 %v2174, 2
    %vm2176 = vcmp.gt.s32.totalorder 0, %v2175
    %v2177 = vsel %vm2176, 0, %v2175
    %v2178 = vsub.s32 32, %v2177
    %v2179 = vshll.u32 %v2170, %v2177
    %v2180 = vshrl.u32 %v2162, %v2178
    %v2181 = vor.u32 %v2179, %v2180
    %v2182 = vsub.s32 4294967266, %v2177
    %v2183 = vadd.s32 %v2182, 127
    %v2184 = vshll.u32 %v2183, 23
    %v2185 = vor.u32 4788187, %v2184
    %v2186 = vand.u32 2147483647, %v2185
    %v2188 = vcvt.s32.f32 %v2181
    %v2189 = vmul.f32 %v2188, %v2186
    %v2190 = vxor.u32 %v2189, 2147483648
    %v2191 = vsel %vm2108, %v2190, %v2189
    %v2192 = vsub.s32 4, %v2168
    %v2193 = vsel %vm2108, %v2192, %v2168
    %v2194 = vsel %vm2107, %v1954, %v2191
    %v2195 = vsel %vm2107, 0, %v2193
    %v2196 = vcosq.f32.pop %v2194
    %v2197 = vsinq.f32.pop %v2194
    %vm2198 = vweird.f32 %v1954
    %v2199 = vadd.s32 %v2195, 3
    %v2200 = vand.u32 %v2199, 3
    %vm2201 = vcmp.lt.s32.totalorder %v2200, 2
    %vm2202 = vcmp.eq.s32.totalorder %v2200, 0
    %v2203 = vxor.u32 %v2197, 2147483648
    %v2204 = vsel %vm2202, %v2196, %v2203
    %vm2205 = vcmp.eq.s32.totalorder %v2200, 2
    %v2206 = vxor.u32 %v2196, 2147483648
    %v2207 = vsel %vm2205, %v2206, %v2197
    %v2208 = vsel %vm2201, %v2204, %v2207
    %v2209 = vsel %vm2198, nan, %v2208
    %v2210 = vadd.f32 %v1953, %v2000
    %v2211 = vadd.f32 %v1954, %v2001
    %v2212 = vadd.f32 %v2001, %v1535
    %v2213 = vpack.c.bf16 %v2105, %v2105
    %v2214 = vpack.c.bf16 %v2209, %v2209
    %2215 = vmatprep.subr.bf16.mxu0 %v1653
    %2216 = vmatpush1.bf16.msra.mxu0 %v1652
    %2217 = vmatprep.subr.bf16.mxu0 %v1651
    %2218 = vmatpush1.bf16.msra.mxu0 %v1650
    %2219 = vmatprep.subr.bf16.mxu0 %v1649
    %2220 = vmatpush1.bf16.msra.mxu0 %v1648
    %2221 = vmatprep.subr.bf16.mxu0 %v1647
    %2222 = vmatpush1.bf16.msra.mxu0 %v1646
    %2223 = vmatprep.subr.bf16.mxu0 %v1645
    %2224 = vmatpush1.bf16.msra.mxu0 %v1644
    %2225 = vmatprep.subr.bf16.mxu0 %v1643
    %2226 = vmatpush1.bf16.msra.mxu0 %v1642
    %2227 = vmatprep.subr.bf16.mxu0 %v1641
    %2228 = vmatpush1.bf16.msra.mxu0 %v1640
    %2229 = vmatprep.subr.bf16.mxu0 %v1639
    %2230 = vmatpush1.bf16.msra.mxu0 %v1638
    %2231 = vmatprep.subr.bf16.mxu0 %v1669
    %2232 = vmatpush2.bf16.msra.mxu0 %v1668
    %2233 = vmatprep.subr.bf16.mxu0 %v1667
    %2234 = vmatpush2.bf16.msra.mxu0 %v1666
    %2235 = vmatprep.subr.bf16.mxu0 %v1665
    %2236 = vmatpush2.bf16.msra.mxu0 %v1664
    %2237 = vmatprep.subr.bf16.mxu0 %v1663
    %2238 = vmatpush2.bf16.msra.mxu0 %v1662
    %2239 = vmatprep.subr.bf16.mxu0 %v1661
    %2240 = vmatpush2.bf16.msra.mxu0 %v1660
    %2241 = vmatprep.subr.bf16.mxu0 %v1659
    %2242 = vmatpush2.bf16.msra.mxu0 %v1658
    %2243 = vmatprep.subr.bf16.mxu0 %v1657
    %2244 = vmatpush2.bf16.msra.mxu0 %v1656
    %2245 = vmatprep.subr.bf16.mxu0 %v1655
    %2246 = vmatpush2.bf16.msra.mxu0 %v1654
    %2247 = vmatprep.mubr.bf16.mxu0 %v2214
    %2248 = vmatmul.mubr.bf16.gmra.mxu0 %v2213
    %v2249 = vpop.f32.mrf.mxu0
    %v2250 = vpop.f32.mrf.mxu0
    %v2251 = vadd.f32 0.0, %v2250
    %v2252 = vpop.f32.mrf.mxu0
    %v2253 = vpop.f32.mrf.mxu0
    %2254 = vdwg.mxu0
    %v2255 = vadd.f32 %v2212, %v2251
    %v2256 = vand.u32 2147483647, %v2210
    %vm2257 = vcmp.le.f32.partialorder %v2256, 0.7853982
    %vm2258 = vcmp.lt.s32.totalorder %v2210, 0
    %v2259 = vand.u32 %v2210, 2139095040
    %v2260 = vshrl.u32 %v2259, 23
    %v2261 = vsub.s32 %v2260, 127
    %v2262 = vand.u32 2147483647, %v2210
    %v2263 = vand.u32 %v2262, 8388607
    %v2264 = vor.u32 %v2263, 8388608
    %v2265 = vsub.s32 0, %v2264
    %v2266 = vadd.s32 %v2261, 1
    %vm2267 = vcmp.gt.s32.totalorder %v2266, 0
    %v2268 = vsel %vm2267, %v2266, 0
    %v2269 = vshrl.u32 %v2268, 5
    %v2270 = vand.u32 %v2268, 31
    %v2271 = vsub.s32 32, %v2270
    %v2272 = vshrl.u32 683565275, %v2271
    %v2273 = vshll.u32 683565275, %v2270
    %v2274 = vshrl.u32 2475754826, %v2271
    %v2275 = vor.u32 %v2273, %v2274
    %v2276 = vshll.u32 2475754826, %v2270
    %v2277 = vshrl.u32 2131351028, %v2271
    %v2278 = vor.u32 %v2276, %v2277
    %v2279 = vshll.u32 2131351028, %v2270
    %v2280 = vshrl.u32 2102212464, %v2271
    %v2281 = vor.u32 %v2279, %v2280
    %v2282 = vshll.u32 2102212464, %v2270
    %v2283 = vshrl.u32 920167782, %v2271
    %v2284 = vor.u32 %v2282, %v2283
    %v2285 = vshll.u32 920167782, %v2270
    %v2286 = vshrl.u32 1326507024, %v2271
    %v2287 = vor.u32 %v2285, %v2286
    %vm2288 = vcmp.lt.s32.totalorder %v2269, 1
    %vm2289 = vcmp.lt.s32.totalorder %v2269, 2
    %vm2290 = vcmp.lt.s32.totalorder %v2269, 3
    %vm2291 = vcmp.lt.s32.totalorder %v2269, 4
    %v2292 = vsel %vm2288, %v2272, %v2275
    %v2293 = vsel %vm2291, %v2281, 2102212464
    %v2294 = vsel %vm2290, %v2278, %v2293
    %v2295 = vsel %vm2289, %v2292, %v2294
    %v2296 = vsel %vm2288, %v2275, %v2278
    %v2297 = vsel %vm2291, %v2284, 920167782
    %v2298 = vsel %vm2290, %v2281, %v2297
    %v2299 = vsel %vm2289, %v2296, %v2298
    %v2300 = vsel %vm2288, %v2278, %v2281
    %v2301 = vsel %vm2291, %v2287, 1326507024
    %v2302 = vsel %vm2290, %v2284, %v2301
    %v2303 = vsel %vm2289, %v2300, %v2302
    %v2304 = vshll.u32 %v2264, 8
    %v2305 = vmul.u32.u64.compose %v2304, %v2303
    %v2306 = vextract.low.u32 %v2305
    %v2307 = vextract.high.u32 %v2305
    %v2308 = vmul.u32.u64.compose %v2304, %v2299
    %v2309 = vextract.low.u32 %v2308
    %v2310 = vextract.high.u32 %v2308
    %v2311 = vmul.u32 %v2304, %v2295
    %v2312 = vadd.s32 %v2307, %v2309
    %vm2313 = vc.u32 %v2307, %v2309
    %v2314 = vadd.s32 %v2310, 1
    %v2315 = vsel %vm2313, %v2314, %v2310
    %v2316 = vadd.s32 %v2311, %v2315
    %v2317 = vadd.s32 %v2316, 536870912
    %v2318 = vshrl.u32 %v2317, 30
    %v2319 = vshll.u32 %v2318, 30
    %v2320 = vsub.s32 %v2316, %v2319
    %vm2321 = vcmp.lt.s32.totalorder %v2320, 0
    %v2322 = vsub.s32 0, %v2320
    %v2323 = vsel %vm2321, %v2322, %v2320
    %v2324 = vclz %v2323
    %v2325 = vsub.s32 %v2324, 2
    %vm2326 = vcmp.gt.s32.totalorder 0, %v2325
    %v2327 = vsel %vm2326, 0, %v2325
    %v2328 = vsub.s32 32, %v2327
    %v2329 = vshll.u32 %v2320, %v2327
    %v2330 = vshrl.u32 %v2312, %v2328
    %v2331 = vor.u32 %v2329, %v2330
    %v2332 = vsub.s32 4294967266, %v2327
    %v2333 = vadd.s32 %v2332, 127
    %v2334 = vshll.u32 %v2333, 23
    %v2335 = vor.u32 4788187, %v2334
    %v2336 = vand.u32 2147483647, %v2335
    %v2338 = vcvt.s32.f32 %v2331
    %v2339 = vmul.f32 %v2338, %v2336
    %v2340 = vxor.u32 %v2339, 2147483648
    %v2341 = vsel %vm2258, %v2340, %v2339
    %v2342 = vsub.s32 4, %v2318
    %v2343 = vsel %vm2258, %v2342, %v2318
    %v2344 = vsel %vm2257, %v2210, %v2341
    %v2345 = vsel %vm2257, 0, %v2343
    %v2346 = vcosq.f32.pop %v2344
    %v2347 = vsinq.f32.pop %v2344
    %vm2348 = vweird.f32 %v2210
    %v2349 = vadd.s32 %v2345, 3
    %v2350 = vand.u32 %v2349, 3
    %vm2351 = vcmp.lt.s32.totalorder %v2350, 2
    %vm2352 = vcmp.eq.s32.totalorder %v2350, 0
    %v2353 = vxor.u32 %v2347, 2147483648
    %v2354 = vsel %vm2352, %v2346, %v2353
    %vm2355 = vcmp.eq.s32.totalorder %v2350, 2
    %v2356 = vxor.u32 %v2346, 2147483648
    %v2357 = vsel %vm2355, %v2356, %v2347
    %v2358 = vsel %vm2351, %v2354, %v2357
    %v2359 = vsel %vm2348, nan, %v2358
    %v2360 = vand.u32 2147483647, %v2211
    %vm2361 = vcmp.le.f32.partialorder %v2360, 0.7853982
    %vm2362 = vcmp.lt.s32.totalorder %v2211, 0
    %v2363 = vand.u32 %v2211, 2139095040
    %v2364 = vshrl.u32 %v2363, 23
    %v2365 = vsub.s32 %v2364, 127
    %v2366 = vand.u32 2147483647, %v2211
    %v2367 = vand.u32 %v2366, 8388607
    %v2368 = vor.u32 %v2367, 8388608
    %v2369 = vsub.s32 0, %v2368
    %v2370 = vadd.s32 %v2365, 1
    %vm2371 = vcmp.gt.s32.totalorder %v2370, 0
    %v2372 = vsel %vm2371, %v2370, 0
    %v2373 = vshrl.u32 %v2372, 5
    %v2374 = vand.u32 %v2372, 31
    %v2375 = vsub.s32 32, %v2374
    %v2376 = vshrl.u32 683565275, %v2375
    %v2377 = vshll.u32 683565275, %v2374
    %v2378 = vshrl.u32 2475754826, %v2375
    %v2379 = vor.u32 %v2377, %v2378
    %v2380 = vshll.u32 2475754826, %v2374
    %v2381 = vshrl.u32 2131351028, %v2375
    %v2382 = vor.u32 %v2380, %v2381
    %v2383 = vshll.u32 2131351028, %v2374
    %v2384 = vshrl.u32 2102212464, %v2375
    %v2385 = vor.u32 %v2383, %v2384
    %v2386 = vshll.u32 2102212464, %v2374
    %v2387 = vshrl.u32 920167782, %v2375
    %v2388 = vor.u32 %v2386, %v2387
    %v2389 = vshll.u32 920167782, %v2374
    %v2390 = vshrl.u32 1326507024, %v2375
    %v2391 = vor.u32 %v2389, %v2390
    %vm2392 = vcmp.lt.s32.totalorder %v2373, 1
    %vm2393 = vcmp.lt.s32.totalorder %v2373, 2
    %vm2394 = vcmp.lt.s32.totalorder %v2373, 3
    %vm2395 = vcmp.lt.s32.totalorder %v2373, 4
    %v2396 = vsel %vm2392, %v2376, %v2379
    %v2397 = vsel %vm2395, %v2385, 2102212464
    %v2398 = vsel %vm2394, %v2382, %v2397
    %v2399 = vsel %vm2393, %v2396, %v2398
    %v2400 = vsel %vm2392, %v2379, %v2382
    %v2401 = vsel %vm2395, %v2388, 920167782
    %v2402 = vsel %vm2394, %v2385, %v2401
    %v2403 = vsel %vm2393, %v2400, %v2402
    %v2404 = vsel %vm2392, %v2382, %v2385
    %v2405 = vsel %vm2395, %v2391, 1326507024
    %v2406 = vsel %vm2394, %v2388, %v2405
    %v2407 = vsel %vm2393, %v2404, %v2406
    %v2408 = vshll.u32 %v2368, 8
    %v2409 = vmul.u32.u64.compose %v2408, %v2407
    %v2410 = vextract.low.u32 %v2409
    %v2411 = vextract.high.u32 %v2409
    %v2412 = vmul.u32.u64.compose %v2408, %v2403
    %v2413 = vextract.low.u32 %v2412
    %v2414 = vextract.high.u32 %v2412
    %v2415 = vmul.u32 %v2408, %v2399
    %v2416 = vadd.s32 %v2411, %v2413
    %vm2417 = vc.u32 %v2411, %v2413
    %v2418 = vadd.s32 %v2414, 1
    %v2419 = vsel %vm2417, %v2418, %v2414
    %v2420 = vadd.s32 %v2415, %v2419
    %v2421 = vadd.s32 %v2420, 536870912
    %v2422 = vshrl.u32 %v2421, 30
    %v2423 = vshll.u32 %v2422, 30
    %v2424 = vsub.s32 %v2420, %v2423
    %vm2425 = vcmp.lt.s32.totalorder %v2424, 0
    %v2426 = vsub.s32 0, %v2424
    %v2427 = vsel %vm2425, %v2426, %v2424
    %v2428 = vclz %v2427
    %v2429 = vsub.s32 %v2428, 2
    %vm2430 = vcmp.gt.s32.totalorder 0, %v2429
    %v2431 = vsel %vm2430, 0, %v2429
    %v2432 = vsub.s32 32, %v2431
    %v2433 = vshll.u32 %v2424, %v2431
    %v2434 = vshrl.u32 %v2416, %v2432
    %v2435 = vor.u32 %v2433, %v2434
    %v2436 = vsub.s32 4294967266, %v2431
    %v2437 = vadd.s32 %v2436, 127
    %v2438 = vshll.u32 %v2437, 23
    %v2439 = vor.u32 4788187, %v2438
    %v2440 = vand.u32 2147483647, %v2439
    %v2442 = vcvt.s32.f32 %v2435
    %v2443 = vmul.f32 %v2442, %v2440
    %v2444 = vxor.u32 %v2443, 2147483648
    %v2445 = vsel %vm2362, %v2444, %v2443
    %v2446 = vsub.s32 4, %v2422
    %v2447 = vsel %vm2362, %v2446, %v2422
    %v2448 = vsel %vm2361, %v2211, %v2445
    %v2449 = vsel %vm2361, 0, %v2447
    %v2450 = vcosq.f32.pop %v2448
    %v2451 = vsinq.f32.pop %v2448
    %vm2452 = vweird.f32 %v2211
    %v2453 = vadd.s32 %v2449, 3
    %v2454 = vand.u32 %v2453, 3
    %vm2455 = vcmp.lt.s32.totalorder %v2454, 2
    %vm2456 = vcmp.eq.s32.totalorder %v2454, 0
    %v2457 = vxor.u32 %v2451, 2147483648
    %v2458 = vsel %vm2456, %v2450, %v2457
    %vm2459 = vcmp.eq.s32.totalorder %v2454, 2
    %v2460 = vxor.u32 %v2450, 2147483648
    %v2461 = vsel %vm2459, %v2460, %v2451
    %v2462 = vsel %vm2455, %v2458, %v2461
    %v2463 = vsel %vm2452, nan, %v2462
    %v2464 = vadd.f32 %v2211, %v2255
    %v2465 = vadd.f32 %v2255, %v1535
    %v2466 = vpack.c.bf16 %v2359, %v2359
    %v2467 = vpack.c.bf16 %v2463, %v2463
    %2468 = vmatprep.subr.bf16.mxu0 %v1653
    %2469 = vmatpush1.bf16.msra.mxu0 %v1652
    %2470 = vmatprep.subr.bf16.mxu0 %v1651
    %2471 = vmatpush1.bf16.msra.mxu0 %v1650
    %2472 = vmatprep.subr.bf16.mxu0 %v1649
    %2473 = vmatpush1.bf16.msra.mxu0 %v1648
    %2474 = vmatprep.subr.bf16.mxu0 %v1647
    %2475 = vmatpush1.bf16.msra.mxu0 %v1646
    %2476 = vmatprep.subr.bf16.mxu0 %v1645
    %2477 = vmatpush1.bf16.msra.mxu0 %v1644
    %2478 = vmatprep.subr.bf16.mxu0 %v1643
    %2479 = vmatpush1.bf16.msra.mxu0 %v1642
    %2480 = vmatprep.subr.bf16.mxu0 %v1641
    %2481 = vmatpush1.bf16.msra.mxu0 %v1640
    %2482 = vmatprep.subr.bf16.mxu0 %v1639
    %2483 = vmatpush1.bf16.msra.mxu0 %v1638
    %2484 = vmatprep.subr.bf16.mxu0 %v1669
    %2485 = vmatpush2.bf16.msra.mxu0 %v1668
    %2486 = vmatprep.subr.bf16.mxu0 %v1667
    %2487 = vmatpush2.bf16.msra.mxu0 %v1666
    %2488 = vmatprep.subr.bf16.mxu0 %v1665
    %2489 = vmatpush2.bf16.msra.mxu0 %v1664
    %2490 = vmatprep.subr.bf16.mxu0 %v1663
    %2491 = vmatpush2.bf16.msra.mxu0 %v1662
    %2492 = vmatprep.subr.bf16.mxu0 %v1661
    %2493 = vmatpush2.bf16.msra.mxu0 %v1660
    %2494 = vmatprep.subr.bf16.mxu0 %v1659
    %2495 = vmatpush2.bf16.msra.mxu0 %v1658
    %2496 = vmatprep.subr.bf16.mxu0 %v1657
    %2497 = vmatpush2.bf16.msra.mxu0 %v1656
    %2498 = vmatprep.subr.bf16.mxu0 %v1655
    %2499 = vmatpush2.bf16.msra.mxu0 %v1654
    %2500 = vmatprep.mubr.bf16.mxu0 %v2467
    %2501 = vmatmul.mubr.bf16.gmra.mxu0 %v2466
    %v2502 = vpop.f32.mrf.mxu0
    %v2503 = vpop.f32.mrf.mxu0
    %v2504 = vadd.f32 0.0, %v2503
    %v2505 = vpop.f32.mrf.mxu0
    %v2506 = vpop.f32.mrf.mxu0
    %2507 = vdwg.mxu0
    %v2508 = vadd.f32 %v2465, %v2504
    %v2509 = vadd.f32 %v2464, %v2508
    %2510 = vst [vmem:[%s5] sm:$0xff] %v2509
    // Predicated region
    $region30: #{net_forward.1} parent=1 // pred_check
      _
    $region31: #{net_forward.1} parent=1 // pred_check_branch
      %2512 = sbr.rel (0) target = $region33
    $region32: #{net_forward.1} parent=1 // pred_region
      _
    $region33: #{net_forward.1} parent=1 // pred_fallthru
      _
    // Predicated region
    $region34: #{net_forward.1} parent=1 // pred_check
      _
    $region35: #{net_forward.1} parent=1 // pred_check_branch
      %2514 = sbr.rel (0) target = $region37
    $region36: #{net_forward.1} parent=1 // pred_region
      _
    $region37: #{net_forward.1} parent=1 // pred_fallthru
      _
    %2515 = vsyncpa [#allocation3], 1
    %2516 = vsyncpa [#allocation5], 1

</llo_original>
